<compile_context>
chip_gen: v6e
topology: v6e:2x2x1
jax: 0.10.0
libtpu: 0.0.40
codegen_flags: <defaults>
</compile_context>

<pallas_src>
import functools
import math

import jax
import jax.numpy as jnp
from jax import lax
from jax.experimental import pallas as pl
from jax.experimental.pallas import tpu as pltpu


def _round_up(x, m):
    return ((x + m - 1) // m) * m


def _pick_tile_rows(H, W, target_lanes=4096):
    """Largest row-tile TH dividing H with TH*W % 128 == 0 and TH*W <= target."""
    unit = 128 // math.gcd(W, 128)
    divisors = [d for d in range(unit, H + 1, unit) if H % d == 0]
    if not divisors:
        return H
    fitting = [d for d in divisors if d * W <= target_lanes]
    return max(fitting) if fitting else min(divisors)


def _resblock_kernel(x_ref, w1_ref, b1_ref, w2_ref, b2_ref, *rest,
                     has_res, W, TH, wpad, lp2):
    """Fused ResBlock forward for one (batch, row-tile) grid point.

    x_ref:    (1, Cin, H*W)        bf16 input image (flattened NCHW), resident per n
    w1_ref:   (9, Cin, Cin)        bf16 conv1 per-tap weights
    b1_ref:   (Cin, 1)             f32 conv1 bias
    w2_ref:   (9, Cout, Cin)       bf16 conv2 per-tap weights
    b2_ref:   (Cout, 1)            f32 conv2 bias
    [wr_ref:  (Cout, Cin)          bf16 residual 1x1 weights (only if has_res)
     br_ref:  (Cout, 1)            f32 residual bias]
    masks_ref:(2, (TH+2)*W)        bf16 {left, right} image-column masks
    o_ref:    (1, Cout, TH*W)      f32 output row tile
    apad_ref: (Cin, wpad+HW+2wpad) bf16 scratch: halo-padded full image (persistent)
    xwin_ref: (Cin, 2wpad+(TH+2)W) bf16 scratch: staged x window for this tile
    h1pad_ref:(Cin, 2*lp2+(TH+2)W) bf16 scratch: lane-padded conv1 output (+halo rows)
    """
    if has_res:
        wr_ref, br_ref, masks_ref, o_ref, apad_ref, xwin_ref, h1pad_ref = rest
    else:
        masks_ref, o_ref, apad_ref, xwin_ref, h1pad_ref = rest

    cin = x_ref.shape[1]
    hw = x_ref.shape[2]
    lt = TH * W                 # output tile lanes
    l1 = (TH + 2) * W           # conv1 (row-halo extended) tile lanes
    xw = xwin_ref.shape[1]
    r = pl.program_id(1)
    last_r = pl.num_programs(1) - 1
    f32, bf16 = jnp.float32, jnp.bfloat16

    # ---- per-image init (row axis is "arbitrary", so r == 0 runs first) ----
    @pl.when(r == 0)
    def _():
        zpad = jnp.zeros((cin, wpad), bf16)
        apad_ref[:, pl.ds(0, wpad)] = zpad                      # rows < 0
        apad_ref[:, pl.ds(wpad + hw, wpad)] = zpad              # rows >= H
        apad_ref[:, pl.ds(wpad + hw + wpad, wpad)] = zpad
        apad_ref[:, pl.ds(wpad, hw)] = x_ref[0]                 # bf16 image copy
        zlp = jnp.zeros((cin, lp2), bf16)
        h1pad_ref[:, pl.ds(0, lp2)] = zlp                       # never rewritten
        h1pad_ref[:, pl.ds(lp2 + l1, lp2)] = zlp

    # ---- stage this tile's (TH+4)-row x window at a static local offset ----
    # Single 128-lane-aligned dynamic copy; every later slice has a static start.
    a0 = pl.multiple_of(r * lt, 128)
    xwin_ref[...] = apad_ref[:, pl.ds(a0, xw)]

    masks = masks_ref[...]                                      # (2, l1) bf16

    def conv3x3(src_ref, base, w_ref, b_ref, n):
        """3x3 'SAME' conv over n flat positions (center tap of output (0,0) at
        src_ref[:, base]) as 9 accumulating K=Cin MXU matmuls; no im2col."""
        mask_l = masks[0:1, :n]          # zero taps wrapping past column 0
        mask_r = masks[1:2, :n]          # zero taps wrapping past column W-1
        acc = None
        for kh in range(3):
            for kw in range(3):
                tap = src_ref[:, pl.ds(base + (kh - 1) * W + (kw - 1), n)]
                if kw == 0:
                    tap = tap * mask_l   # bf16 VPU multiply (v5e upconverts)
                elif kw == 2:
                    tap = tap * mask_r
                d = jnp.dot(w_ref[kh * 3 + kw], tap, preferred_element_type=f32)
                acc = d if acc is None else acc + d
        return jnp.maximum(acc + b_ref[...], 0.0)               # f32 bias + ReLU

    # ---- conv1 (Cin -> Cin), computed with a +-1 row halo for conv2 ----
    h1e = conv3x3(xwin_ref, wpad - W, w1_ref, b1_ref, l1)       # (cin, l1) f32
    h1pad_ref[:, pl.ds(lp2, l1)] = h1e.astype(bf16)
    # conv2's zero padding: h1 rows outside the image must be exactly zero.
    @pl.when(r == 0)
    def _():
        h1pad_ref[:, pl.ds(lp2, W)] = jnp.zeros((cin, W), bf16)
    @pl.when(r == last_r)
    def _():
        h1pad_ref[:, pl.ds(lp2 + (TH + 1) * W, W)] = jnp.zeros((cin, W), bf16)

    # ---- conv2 (Cin -> Cout) on the TH output rows ----
    h2 = conv3x3(h1pad_ref, lp2 + W, w2_ref, b2_ref, lt)        # (cout, lt) f32

    # ---- residual path: reuse the staged bf16 x window ----
    x_tile = xwin_ref[:, pl.ds(wpad, lt)]                       # (cin, lt) bf16
    if has_res:
        res = jnp.dot(wr_ref[...], x_tile,
                      preferred_element_type=f32) + br_ref[...]
    else:
        res = x_tile.astype(f32)                                # nn.Identity

    o_ref[0] = (h2 + res).astype(o_ref.dtype)


@functools.partial(jax.jit, static_argnames=("in_dim", "dim", "tile_rows"))
def resblock_forward(x_nchw, params, *, in_dim, dim, tile_rows=None):
    """x_nchw: (N, Cin, H, W) float32 -> (N, Cout, H, W) float32."""
    w1, b1, w2, b2, wr, br = params      # conv weights in HWIO (3, 3, Cin, Cout)
    N, Cin, H, W = x_nchw.shape
    assert Cin == in_dim
    Cout = dim
    HW = H * W
    assert HW % 128 == 0, "H*W must be a multiple of 128 for lane-dense blocks"
    # TODO(synk): pad the flattened spatial axis when H*W is not a multiple of 128.

    has_res = (in_dim != dim)

    TH = tile_rows if tile_rows is not None else _pick_tile_rows(H, W)
    assert H % TH == 0 and (TH * W) % 128 == 0
    R = H // TH                          # row tiles per image
    LT = TH * W                          # output tile lanes
    L1 = (TH + 2) * W                    # conv1 halo-extended tile lanes
    WPAD = _round_up(2 * W + 1, 128)     # lane-aligned image halo (>= 2 rows + 1)
    PTOT = WPAD + HW + 2 * WPAD
    XW = 2 * WPAD + L1                   # staged x window lanes
    LP2 = 128                            # lane pad for the h1 buffer
    H1TOT = 2 * LP2 + L1

    def tap_w(w_hwio):                   # (3,3,ci,co) -> (9, co, ci) bf16
        ci, co = w_hwio.shape[2], w_hwio.shape[3]
        return (jnp.transpose(w_hwio, (0, 1, 3, 2))
                .reshape(9, co, ci).astype(jnp.bfloat16))

    w1f = tap_w(w1)                              # (9, Cin, Cin)
    w2f = tap_w(w2)                              # (9, Cout, Cin)
    b1c = b1.reshape(Cin, 1).astype(jnp.float32)
    b2c = b2.reshape(Cout, 1).astype(jnp.float32)

    x_flat = x_nchw.reshape(N, Cin, HW).astype(jnp.bfloat16)    # bf16 input DMA

    col_idx = jnp.arange(L1, dtype=jnp.int32) % W
    masks = jnp.stack([(col_idx != 0), (col_idx != W - 1)]).astype(jnp.bfloat16)

    inputs = [x_flat, w1f, b1c, w2f, b2c]
    in_specs = [
        pl.BlockSpec((1, Cin, HW), lambda n, r: (n, 0, 0)),     # resident per n
        pl.BlockSpec((9, Cin, Cin), lambda n, r: (0, 0, 0)),
        pl.BlockSpec((Cin, 1), lambda n, r: (0, 0)),
        pl.BlockSpec((9, Cout, Cin), lambda n, r: (0, 0, 0)),
        pl.BlockSpec((Cout, 1), lambda n, r: (0, 0)),
    ]
    if has_res:
        wrf = jnp.transpose(wr, (1, 0)).astype(jnp.bfloat16)    # (Cout, Cin)
        brc = br.reshape(Cout, 1).astype(jnp.float32)
        inputs += [wrf, brc]
        in_specs += [pl.BlockSpec((Cout, Cin), lambda n, r: (0, 0)),
                     pl.BlockSpec((Cout, 1), lambda n, r: (0, 0))]
    inputs.append(masks)
    in_specs.append(pl.BlockSpec((2, L1), lambda n, r: (0, 0)))

    kernel = functools.partial(_resblock_kernel, has_res=has_res,
                               W=W, TH=TH, wpad=WPAD, lp2=LP2)

    # VMEM budget: double-buffered x / out blocks, persistent scratch, weights,
    # plus generous headroom for f32 value temps (acc, h1e, masked taps).
    est = (2 * Cin * HW * 2
           + 2 * Cout * LT * 4
           + Cin * (PTOT + XW + H1TOT) * 2
           + (9 * Cin * (Cin + Cout) + Cout * Cin + Cin + 2 * Cout) * 4
           + 2 * L1 * 2
           + 10 * max(Cin, Cout) * L1 * 4)
    vmem_limit = int(min(64 << 20, max(2 * est, 32 << 20)))

    out_flat = pl.pallas_call(
        kernel,
        out_shape=jax.ShapeDtypeStruct((N, Cout, HW), jnp.float32),
        grid_spec=pltpu.PrefetchScalarGridSpec(
            num_scalar_prefetch=0,
            grid=(N, R),
            in_specs=in_specs,
            out_specs=pl.BlockSpec((1, Cout, LT), lambda n, r: (n, 0, r)),
            scratch_shapes=[pltpu.VMEM((Cin, PTOT), jnp.bfloat16),
                            pltpu.VMEM((Cin, XW), jnp.bfloat16),
                            pltpu.VMEM((Cin, H1TOT), jnp.bfloat16)],
        ),
        compiler_params=pltpu.CompilerParams(
            dimension_semantics=("parallel", "arbitrary"),
            vmem_limit_bytes=vmem_limit),
    )(*inputs)

    # (N, Cout, H*W) -> (N, Cout, H, W): free reshape, already NCHW.
    return out_flat.reshape(N, Cout, H, W)


def make_params(key, in_dim, dim):
    """Deterministic synthetic parameters (shapes from ResBlock.__init__)."""
    ks = jax.random.split(key, 6)
    # conv weights in HWIO layout (kh, kw, Cin, Cout)
    w1 = jax.random.normal(ks[0], (3, 3, in_dim, in_dim), jnp.float32) * 0.1
    b1 = jax.random.normal(ks[1], (in_dim,), jnp.float32) * 0.1
    w2 = jax.random.normal(ks[2], (3, 3, in_dim, dim), jnp.float32) * 0.1
    b2 = jax.random.normal(ks[3], (dim,), jnp.float32) * 0.1
    if in_dim != dim:
        wr = jax.random.normal(ks[4], (in_dim, dim), jnp.float32) * 0.1
        br = jax.random.normal(ks[5], (dim,), jnp.float32) * 0.1
    else:
        # nn.Identity() expressed (for the reference only) as identity weights.
        wr = jnp.eye(in_dim, dtype=jnp.float32)
        br = jnp.zeros((dim,), jnp.float32)
    return (w1, b1, w2, b2, wr, br)


def reference_forward(x_nchw, params, in_dim, dim):
    """Pure-JAX f32 reference (NHWC convs) for correctness check."""
    w1, b1, w2, b2, wr, br = params
    x = jnp.transpose(x_nchw, (0, 2, 3, 1))
    dn = ("NHWC", "HWIO", "NHWC")

    def conv3(x, w, b):
        y = lax.conv_general_dilated(x, w, (1, 1), "SAME", dimension_numbers=dn)
        return y + b.reshape(1, 1, 1, -1)

    h = jnp.maximum(conv3(x, w1, b1), 0.0)
    h = jnp.maximum(conv3(h, w2, b2), 0.0)
    res = jnp.einsum("nhwc,cd->nhwd", x, wr) + br.reshape(1, 1, 1, -1)
    return jnp.transpose(h + res, (0, 3, 1, 2))


if __name__ == "__main__":
    key = jax.random.PRNGKey(0)

    # Case 1: in_dim != dim -> residual 1x1 conv; 4 row tiles (exercises the
    # first / interior / last tile halo handling of the spatial grid axis).
    N, in_dim, dim, H, W = 2, 4, 8, 32, 16
    kx, kp, key = jax.random.split(key, 3)
    x = jax.random.normal(kx, (N, in_dim, H, W), jnp.float32)
    params = make_params(kp, in_dim, dim)
    out = jax.block_until_ready(
        resblock_forward(x, params, in_dim=in_dim, dim=dim, tile_rows=8))
    ref = reference_forward(x, params, in_dim, dim)
    assert out.shape == (N, dim, H, W)
    # bf16 activations / MXU operands -> loosened tolerance vs the f32 reference.
    assert jnp.allclose(out, ref, atol=5e-2, rtol=5e-2), \
        f"max abs err {jnp.max(jnp.abs(out - ref))}"

    # Case 2: in_dim == dim -> nn.Identity residual; single row tile (R = 1).
    in_dim2 = dim2 = 8
    kx2, kp2 = jax.random.split(key)
    x2 = jax.random.normal(kx2, (N, in_dim2, 16, 16), jnp.float32)
    params2 = make_params(kp2, in_dim2, dim2)
    out2 = jax.block_until_ready(
        resblock_forward(x2, params2, in_dim=in_dim2, dim=dim2))
    ref2 = reference_forward(x2, params2, in_dim2, dim2)
    assert jnp.allclose(out2, ref2, atol=5e-2, rtol=5e-2), \
        f"max abs err {jnp.max(jnp.abs(out2 - ref2))}"

    print("KERNEL_OK")
</pallas_src>

<mosaic_0001>
module attributes {stable_mosaic.version = 11 : i64} {
  func.func @_resblock_kernel(%arg0: i32, %arg1: i32, %arg2: memref<1x4x512xbf16, #tpu.memory_space<vmem>>, %arg3: memref<9x4x4xbf16, #tpu.memory_space<vmem>>, %arg4: memref<4x1xf32, #tpu.memory_space<vmem>>, %arg5: memref<9x8x4xbf16, #tpu.memory_space<vmem>>, %arg6: memref<8x1xf32, #tpu.memory_space<vmem>>, %arg7: memref<8x4xbf16, #tpu.memory_space<vmem>>, %arg8: memref<8x1xf32, #tpu.memory_space<vmem>>, %arg9: memref<2x160xbf16, #tpu.memory_space<vmem>>, %arg10: memref<1x8x128xf32, #tpu.memory_space<vmem>>, %arg11: memref<4x896xbf16, #tpu.memory_space<vmem>>, %arg12: memref<4x416xbf16, #tpu.memory_space<vmem>>, %arg13: memref<4x416xbf16, #tpu.memory_space<vmem>>) attributes {dimension_semantics = [#tpu.dimension_semantics<parallel>, #tpu.dimension_semantics<arbitrary>], iteration_bounds = array<i64: 2, 4>, scalar_prefetch = 0 : i64, scratch_operands = 3 : i64, tpu.core_type = #tpu.core_type<tc>, window_params = [{transform_indices = @transform_0, window_bounds = array<i64: 1, 4, 512>}, {pipeline_mode = #tpu.pipeline_mode<synchronous>, transform_indices = @transform_1, window_bounds = array<i64: 9, 4, 4>}, {pipeline_mode = #tpu.pipeline_mode<synchronous>, transform_indices = @transform_2, window_bounds = array<i64: 4, 1>}, {pipeline_mode = #tpu.pipeline_mode<synchronous>, transform_indices = @transform_3, window_bounds = array<i64: 9, 8, 4>}, {pipeline_mode = #tpu.pipeline_mode<synchronous>, transform_indices = @transform_4, window_bounds = array<i64: 8, 1>}, {pipeline_mode = #tpu.pipeline_mode<synchronous>, transform_indices = @transform_5, window_bounds = array<i64: 8, 4>}, {pipeline_mode = #tpu.pipeline_mode<synchronous>, transform_indices = @transform_6, window_bounds = array<i64: 8, 1>}, {pipeline_mode = #tpu.pipeline_mode<synchronous>, transform_indices = @transform_7, window_bounds = array<i64: 2, 160>}, {transform_indices = @transform_8, window_bounds = array<i64: 1, 8, 128>}]} {
    %c0_i32 = arith.constant 0 : i32
    %0 = arith.cmpi eq, %arg1, %c0_i32 : i32
    %1 = arith.extui %0 : i1 to i32
    %c0_i32_0 = arith.constant 0 : i32
    %2 = arith.cmpi ne, %1, %c0_i32_0 : i32
    scf.if %2 {
      %cst_110 = arith.constant 0.000000e+00 : bf16
      %153 = vector.broadcast %cst_110 : bf16 to vector<4x128xbf16>
      %c0_111 = arith.constant 0 : index
      %c0_112 = arith.constant 0 : index
      %154 = vector.load %arg11[%c0_111, %c0_112] : memref<4x896xbf16, #tpu.memory_space<vmem>>, vector<4x128xbf16>
      tpu.vector_store %arg11[%c0_111, %c0_112], %153 {strides = array<i32>} : memref<4x896xbf16, #tpu.memory_space<vmem>>, vector<4x128xbf16>,
      %c0_113 = arith.constant 0 : index
      %c640 = arith.constant 640 : index
      %155 = vector.load %arg11[%c0_113, %c640] : memref<4x896xbf16, #tpu.memory_space<vmem>>, vector<4x128xbf16>
      tpu.vector_store %arg11[%c0_113, %c640], %153 {strides = array<i32>} : memref<4x896xbf16, #tpu.memory_space<vmem>>, vector<4x128xbf16>,
      %c0_114 = arith.constant 0 : index
      %c768 = arith.constant 768 : index
      %156 = vector.load %arg11[%c0_114, %c768] : memref<4x896xbf16, #tpu.memory_space<vmem>>, vector<4x128xbf16>
      tpu.vector_store %arg11[%c0_114, %c768], %153 {strides = array<i32>} : memref<4x896xbf16, #tpu.memory_space<vmem>>, vector<4x128xbf16>,
      %c0_115 = arith.constant 0 : index
      %c0_116 = arith.constant 0 : index
      %c0_117 = arith.constant 0 : index
      %157 = vector.load %arg2[%c0_115, %c0_116, %c0_117] : memref<1x4x512xbf16, #tpu.memory_space<vmem>>, vector<1x4x512xbf16>
      %158 = vector.shape_cast %157 : vector<1x4x512xbf16> to vector<4x512xbf16>
      %c0_118 = arith.constant 0 : index
      %c128_119 = arith.constant 128 : index
      %159 = vector.load %arg11[%c0_118, %c128_119] : memref<4x896xbf16, #tpu.memory_space<vmem>>, vector<4x512xbf16>
      tpu.vector_store %arg11[%c0_118, %c128_119], %158 {strides = array<i32>} : memref<4x896xbf16, #tpu.memory_space<vmem>>, vector<4x512xbf16>,
      %cst_120 = arith.constant 0.000000e+00 : bf16
      %160 = vector.broadcast %cst_120 : bf16 to vector<4x128xbf16>
      %c0_121 = arith.constant 0 : index
      %c0_122 = arith.constant 0 : index
      %161 = vector.load %arg13[%c0_121, %c0_122] : memref<4x416xbf16, #tpu.memory_space<vmem>>, vector<4x128xbf16>
      tpu.vector_store %arg13[%c0_121, %c0_122], %160 {strides = array<i32>} : memref<4x416xbf16, #tpu.memory_space<vmem>>, vector<4x128xbf16>,
      %c0_123 = arith.constant 0 : index
      %c288 = arith.constant 288 : index
      %162 = vector.load %arg13[%c0_123, %c288] : memref<4x416xbf16, #tpu.memory_space<vmem>>, vector<4x128xbf16>
      tpu.vector_store %arg13[%c0_123, %c288], %160 {strides = array<i32>} : memref<4x416xbf16, #tpu.memory_space<vmem>>, vector<4x128xbf16>,
    } else {
    }
    %c128_i32 = arith.constant 128 : i32
    %3 = arith.muli %arg1, %c128_i32 : i32
    %4 = tpu.assume_multiple %3, 128 : i32
    %c0 = arith.constant 0 : index
    %5 = arith.index_cast %4 : i32 to index
    %6 = vector.load %arg11[%c0, %5] : memref<4x896xbf16, #tpu.memory_space<vmem>>, vector<4x416xbf16>
    %c0_1 = arith.constant 0 : index
    %c0_2 = arith.constant 0 : index
    %7 = vector.load %arg12[%c0_1, %c0_2] : memref<4x416xbf16, #tpu.memory_space<vmem>>, vector<4x416xbf16>
    tpu.vector_store %arg12[%c0_1, %c0_2], %6 {strides = array<i32>} : memref<4x416xbf16, #tpu.memory_space<vmem>>, vector<4x416xbf16>,
    %c0_3 = arith.constant 0 : index
    %c0_4 = arith.constant 0 : index
    %8 = vector.load %arg9[%c0_3, %c0_4] : memref<2x160xbf16, #tpu.memory_space<vmem>>, vector<2x160xbf16>
    %9 = vector.extract_strided_slice %8 {offsets = [0, 0], sizes = [1, 160], strides = [1, 1]} : vector<2x160xbf16> to vector<1x160xbf16>
    %10 = vector.extract_strided_slice %8 {offsets = [1, 0], sizes = [1, 160], strides = [1, 1]} : vector<2x160xbf16> to vector<1x160xbf16>
    %c0_5 = arith.constant 0 : index
    %c95 = arith.constant 95 : index
    %11 = vector.load %arg12[%c0_5, %c95] : memref<4x416xbf16, #tpu.memory_space<vmem>>, vector<4x160xbf16>
    %12 = vector.broadcast %9 : vector<1x160xbf16> to vector<4x160xbf16>
    %13 = arith.mulf %11, %12 : vector<4x160xbf16>
    %c0_6 = arith.constant 0 : index
    %c0_7 = arith.constant 0 : index
    %c0_8 = arith.constant 0 : index
    %14 = vector.load %arg3[%c0_6, %c0_7, %c0_8] : memref<9x4x4xbf16, #tpu.memory_space<vmem>>, vector<1x4x4xbf16>
    %15 = vector.shape_cast %14 : vector<1x4x4xbf16> to vector<4x4xbf16>
    %cst = arith.constant dense<0.000000e+00> : vector<4x160xf32>
    %16 = tpu.matmul %15, %13, %cst {dimension_numbers = #tpu.dot_dimension_numbers<[1], [0], [0], [1], [0, 0, 1, 1], [], []>} : vector<4x4xbf16>, vector<4x160xbf16>, vector<4x160xf32> -> vector<4x160xf32>
    %c0_9 = arith.constant 0 : index
    %c96 = arith.constant 96 : index
    %17 = vector.load %arg12[%c0_9, %c96] : memref<4x416xbf16, #tpu.memory_space<vmem>>, vector<4x160xbf16>
    %c1 = arith.constant 1 : index
    %c0_10 = arith.constant 0 : index
    %c0_11 = arith.constant 0 : index
    %18 = vector.load %arg3[%c1, %c0_10, %c0_11] : memref<9x4x4xbf16, #tpu.memory_space<vmem>>, vector<1x4x4xbf16>
    %19 = vector.shape_cast %18 : vector<1x4x4xbf16> to vector<4x4xbf16>
    %cst_12 = arith.constant dense<0.000000e+00> : vector<4x160xf32>
    %20 = tpu.matmul %19, %17, %cst_12 {dimension_numbers = #tpu.dot_dimension_numbers<[1], [0], [0], [1], [0, 0, 1, 1], [], []>} : vector<4x4xbf16>, vector<4x160xbf16>, vector<4x160xf32> -> vector<4x160xf32>
    %21 = arith.addf %16, %20 : vector<4x160xf32>
    %c0_13 = arith.constant 0 : index
    %c97 = arith.constant 97 : index
    %22 = vector.load %arg12[%c0_13, %c97] : memref<4x416xbf16, #tpu.memory_space<vmem>>, vector<4x160xbf16>
    %23 = vector.broadcast %10 : vector<1x160xbf16> to vector<4x160xbf16>
    %24 = arith.mulf %22, %23 : vector<4x160xbf16>
    %c2 = arith.constant 2 : index
    %c0_14 = arith.constant 0 : index
    %c0_15 = arith.constant 0 : index
    %25 = vector.load %arg3[%c2, %c0_14, %c0_15] : memref<9x4x4xbf16, #tpu.memory_space<vmem>>, vector<1x4x4xbf16>
    %26 = vector.shape_cast %25 : vector<1x4x4xbf16> to vector<4x4xbf16>
    %cst_16 = arith.constant dense<0.000000e+00> : vector<4x160xf32>
    %27 = tpu.matmul %26, %24, %cst_16 {dimension_numbers = #tpu.dot_dimension_numbers<[1], [0], [0], [1], [0, 0, 1, 1], [], []>} : vector<4x4xbf16>, vector<4x160xbf16>, vector<4x160xf32> -> vector<4x160xf32>
    %28 = arith.addf %21, %27 : vector<4x160xf32>
    %c0_17 = arith.constant 0 : index
    %c111 = arith.constant 111 : index
    %29 = vector.load %arg12[%c0_17, %c111] : memref<4x416xbf16, #tpu.memory_space<vmem>>, vector<4x160xbf16>
    %30 = vector.broadcast %9 : vector<1x160xbf16> to vector<4x160xbf16>
    %31 = arith.mulf %29, %30 : vector<4x160xbf16>
    %c3 = arith.constant 3 : index
    %c0_18 = arith.constant 0 : index
    %c0_19 = arith.constant 0 : index
    %32 = vector.load %arg3[%c3, %c0_18, %c0_19] : memref<9x4x4xbf16, #tpu.memory_space<vmem>>, vector<1x4x4xbf16>
    %33 = vector.shape_cast %32 : vector<1x4x4xbf16> to vector<4x4xbf16>
    %cst_20 = arith.constant dense<0.000000e+00> : vector<4x160xf32>
    %34 = tpu.matmul %33, %31, %cst_20 {dimension_numbers = #tpu.dot_dimension_numbers<[1], [0], [0], [1], [0, 0, 1, 1], [], []>} : vector<4x4xbf16>, vector<4x160xbf16>, vector<4x160xf32> -> vector<4x160xf32>
    %35 = arith.addf %28, %34 : vector<4x160xf32>
    %c0_21 = arith.constant 0 : index
    %c112 = arith.constant 112 : index
    %36 = vector.load %arg12[%c0_21, %c112] : memref<4x416xbf16, #tpu.memory_space<vmem>>, vector<4x160xbf16>
    %c4 = arith.constant 4 : index
    %c0_22 = arith.constant 0 : index
    %c0_23 = arith.constant 0 : index
    %37 = vector.load %arg3[%c4, %c0_22, %c0_23] : memref<9x4x4xbf16, #tpu.memory_space<vmem>>, vector<1x4x4xbf16>
    %38 = vector.shape_cast %37 : vector<1x4x4xbf16> to vector<4x4xbf16>
    %cst_24 = arith.constant dense<0.000000e+00> : vector<4x160xf32>
    %39 = tpu.matmul %38, %36, %cst_24 {dimension_numbers = #tpu.dot_dimension_numbers<[1], [0], [0], [1], [0, 0, 1, 1], [], []>} : vector<4x4xbf16>, vector<4x160xbf16>, vector<4x160xf32> -> vector<4x160xf32>
    %40 = arith.addf %35, %39 : vector<4x160xf32>
    %c0_25 = arith.constant 0 : index
    %c113 = arith.constant 113 : index
    %41 = vector.load %arg12[%c0_25, %c113] : memref<4x416xbf16, #tpu.memory_space<vmem>>, vector<4x160xbf16>
    %42 = vector.broadcast %10 : vector<1x160xbf16> to vector<4x160xbf16>
    %43 = arith.mulf %41, %42 : vector<4x160xbf16>
    %c5 = arith.constant 5 : index
    %c0_26 = arith.constant 0 : index
    %c0_27 = arith.constant 0 : index
    %44 = vector.load %arg3[%c5, %c0_26, %c0_27] : memref<9x4x4xbf16, #tpu.memory_space<vmem>>, vector<1x4x4xbf16>
    %45 = vector.shape_cast %44 : vector<1x4x4xbf16> to vector<4x4xbf16>
    %cst_28 = arith.constant dense<0.000000e+00> : vector<4x160xf32>
    %46 = tpu.matmul %45, %43, %cst_28 {dimension_numbers = #tpu.dot_dimension_numbers<[1], [0], [0], [1], [0, 0, 1, 1], [], []>} : vector<4x4xbf16>, vector<4x160xbf16>, vector<4x160xf32> -> vector<4x160xf32>
    %47 = arith.addf %40, %46 : vector<4x160xf32>
    %c0_29 = arith.constant 0 : index
    %c127 = arith.constant 127 : index
    %48 = vector.load %arg12[%c0_29, %c127] : memref<4x416xbf16, #tpu.memory_space<vmem>>, vector<4x160xbf16>
    %49 = vector.broadcast %9 : vector<1x160xbf16> to vector<4x160xbf16>
    %50 = arith.mulf %48, %49 : vector<4x160xbf16>
    %c6 = arith.constant 6 : index
    %c0_30 = arith.constant 0 : index
    %c0_31 = arith.constant 0 : index
    %51 = vector.load %arg3[%c6, %c0_30, %c0_31] : memref<9x4x4xbf16, #tpu.memory_space<vmem>>, vector<1x4x4xbf16>
    %52 = vector.shape_cast %51 : vector<1x4x4xbf16> to vector<4x4xbf16>
    %cst_32 = arith.constant dense<0.000000e+00> : vector<4x160xf32>
    %53 = tpu.matmul %52, %50, %cst_32 {dimension_numbers = #tpu.dot_dimension_numbers<[1], [0], [0], [1], [0, 0, 1, 1], [], []>} : vector<4x4xbf16>, vector<4x160xbf16>, vector<4x160xf32> -> vector<4x160xf32>
    %54 = arith.addf %47, %53 : vector<4x160xf32>
    %c0_33 = arith.constant 0 : index
    %c128 = arith.constant 128 : index
    %55 = vector.load %arg12[%c0_33, %c128] : memref<4x416xbf16, #tpu.memory_space<vmem>>, vector<4x160xbf16>
    %c7 = arith.constant 7 : index
    %c0_34 = arith.constant 0 : index
    %c0_35 = arith.constant 0 : index
    %56 = vector.load %arg3[%c7, %c0_34, %c0_35] : memref<9x4x4xbf16, #tpu.memory_space<vmem>>, vector<1x4x4xbf16>
    %57 = vector.shape_cast %56 : vector<1x4x4xbf16> to vector<4x4xbf16>
    %cst_36 = arith.constant dense<0.000000e+00> : vector<4x160xf32>
    %58 = tpu.matmul %57, %55, %cst_36 {dimension_numbers = #tpu.dot_dimension_numbers<[1], [0], [0], [1], [0, 0, 1, 1], [], []>} : vector<4x4xbf16>, vector<4x160xbf16>, vector<4x160xf32> -> vector<4x160xf32>
    %59 = arith.addf %54, %58 : vector<4x160xf32>
    %c0_37 = arith.constant 0 : index
    %c129 = arith.constant 129 : index
    %60 = vector.load %arg12[%c0_37, %c129] : memref<4x416xbf16, #tpu.memory_space<vmem>>, vector<4x160xbf16>
    %61 = vector.broadcast %10 : vector<1x160xbf16> to vector<4x160xbf16>
    %62 = arith.mulf %60, %61 : vector<4x160xbf16>
    %c8 = arith.constant 8 : index
    %c0_38 = arith.constant 0 : index
    %c0_39 = arith.constant 0 : index
    %63 = vector.load %arg3[%c8, %c0_38, %c0_39] : memref<9x4x4xbf16, #tpu.memory_space<vmem>>, vector<1x4x4xbf16>
    %64 = vector.shape_cast %63 : vector<1x4x4xbf16> to vector<4x4xbf16>
    %cst_40 = arith.constant dense<0.000000e+00> : vector<4x160xf32>
    %65 = tpu.matmul %64, %62, %cst_40 {dimension_numbers = #tpu.dot_dimension_numbers<[1], [0], [0], [1], [0, 0, 1, 1], [], []>} : vector<4x4xbf16>, vector<4x160xbf16>, vector<4x160xf32> -> vector<4x160xf32>
    %66 = arith.addf %59, %65 : vector<4x160xf32>
    %c0_41 = arith.constant 0 : index
    %c0_42 = arith.constant 0 : index
    %67 = vector.load %arg4[%c0_41, %c0_42] : memref<4x1xf32, #tpu.memory_space<vmem>>, vector<4x1xf32>
    %68 = vector.broadcast %67 : vector<4x1xf32> to vector<4x160xf32>
    %69 = arith.addf %66, %68 : vector<4x160xf32>
    %cst_43 = arith.constant 0.000000e+00 : f32
    %70 = vector.broadcast %cst_43 : f32 to vector<4x160xf32>
    %71 = arith.maximumf %69, %70 : vector<4x160xf32>
    %72 = arith.truncf %71 : vector<4x160xf32> to vector<4x160xbf16>
    %c0_44 = arith.constant 0 : index
    %c128_45 = arith.constant 128 : index
    %73 = vector.load %arg13[%c0_44, %c128_45] : memref<4x416xbf16, #tpu.memory_space<vmem>>, vector<4x160xbf16>
    tpu.vector_store %arg13[%c0_44, %c128_45], %72 {strides = array<i32>} : memref<4x416xbf16, #tpu.memory_space<vmem>>, vector<4x160xbf16>,
    %c0_i32_46 = arith.constant 0 : i32
    %74 = arith.cmpi eq, %arg1, %c0_i32_46 : i32
    %75 = arith.extui %74 : i1 to i32
    %c0_i32_47 = arith.constant 0 : i32
    %76 = arith.cmpi ne, %75, %c0_i32_47 : i32
    scf.if %76 {
      %cst_110 = arith.constant 0.000000e+00 : bf16
      %153 = vector.broadcast %cst_110 : bf16 to vector<4x16xbf16>
      %c0_111 = arith.constant 0 : index
      %c128_112 = arith.constant 128 : index
      %154 = vector.load %arg13[%c0_111, %c128_112] : memref<4x416xbf16, #tpu.memory_space<vmem>>, vector<4x16xbf16>
      tpu.vector_store %arg13[%c0_111, %c128_112], %153 {strides = array<i32>} : memref<4x416xbf16, #tpu.memory_space<vmem>>, vector<4x16xbf16>,
    } else {
    }
    %c3_i32 = arith.constant 3 : i32
    %77 = arith.cmpi eq, %arg1, %c3_i32 : i32
    %78 = arith.extui %77 : i1 to i32
    %c0_i32_48 = arith.constant 0 : i32
    %79 = arith.cmpi ne, %78, %c0_i32_48 : i32
    scf.if %79 {
      %cst_110 = arith.constant 0.000000e+00 : bf16
      %153 = vector.broadcast %cst_110 : bf16 to vector<4x16xbf16>
      %c0_111 = arith.constant 0 : index
      %c272 = arith.constant 272 : index
      %154 = vector.load %arg13[%c0_111, %c272] : memref<4x416xbf16, #tpu.memory_space<vmem>>, vector<4x16xbf16>
      tpu.vector_store %arg13[%c0_111, %c272], %153 {strides = array<i32>} : memref<4x416xbf16, #tpu.memory_space<vmem>>, vector<4x16xbf16>,
    } else {
    }
    %80 = vector.extract_strided_slice %8 {offsets = [0, 0], sizes = [1, 128], strides = [1, 1]} : vector<2x160xbf16> to vector<1x128xbf16>
    %81 = vector.extract_strided_slice %8 {offsets = [1, 0], sizes = [1, 128], strides = [1, 1]} : vector<2x160xbf16> to vector<1x128xbf16>
    %c0_49 = arith.constant 0 : index
    %c127_50 = arith.constant 127 : index
    %82 = vector.load %arg13[%c0_49, %c127_50] : memref<4x416xbf16, #tpu.memory_space<vmem>>, vector<4x128xbf16>
    %83 = vector.broadcast %80 : vector<1x128xbf16> to vector<4x128xbf16>
    %84 = arith.mulf %82, %83 : vector<4x128xbf16>
    %c0_51 = arith.constant 0 : index
    %c0_52 = arith.constant 0 : index
    %c0_53 = arith.constant 0 : index
    %85 = vector.load %arg5[%c0_51, %c0_52, %c0_53] : memref<9x8x4xbf16, #tpu.memory_space<vmem>>, vector<1x8x4xbf16>
    %86 = vector.shape_cast %85 : vector<1x8x4xbf16> to vector<8x4xbf16>
    %cst_54 = arith.constant dense<0.000000e+00> : vector<8x128xf32>
    %87 = tpu.matmul %86, %84, %cst_54 {dimension_numbers = #tpu.dot_dimension_numbers<[1], [0], [0], [1], [0, 0, 1, 1], [], []>} : vector<8x4xbf16>, vector<4x128xbf16>, vector<8x128xf32> -> vector<8x128xf32>
    %c0_55 = arith.constant 0 : index
    %c128_56 = arith.constant 128 : index
    %88 = vector.load %arg13[%c0_55, %c128_56] : memref<4x416xbf16, #tpu.memory_space<vmem>>, vector<4x128xbf16>
    %c1_57 = arith.constant 1 : index
    %c0_58 = arith.constant 0 : index
    %c0_59 = arith.constant 0 : index
    %89 = vector.load %arg5[%c1_57, %c0_58, %c0_59] : memref<9x8x4xbf16, #tpu.memory_space<vmem>>, vector<1x8x4xbf16>
    %90 = vector.shape_cast %89 : vector<1x8x4xbf16> to vector<8x4xbf16>
    %cst_60 = arith.constant dense<0.000000e+00> : vector<8x128xf32>
    %91 = tpu.matmul %90, %88, %cst_60 {dimension_numbers = #tpu.dot_dimension_numbers<[1], [0], [0], [1], [0, 0, 1, 1], [], []>} : vector<8x4xbf16>, vector<4x128xbf16>, vector<8x128xf32> -> vector<8x128xf32>
    %92 = arith.addf %87, %91 : vector<8x128xf32>
    %c0_61 = arith.constant 0 : index
    %c129_62 = arith.constant 129 : index
    %93 = vector.load %arg13[%c0_61, %c129_62] : memref<4x416xbf16, #tpu.memory_space<vmem>>, vector<4x128xbf16>
    %94 = vector.broadcast %81 : vector<1x128xbf16> to vector<4x128xbf16>
    %95 = arith.mulf %93, %94 : vector<4x128xbf16>
    %c2_63 = arith.constant 2 : index
    %c0_64 = arith.constant 0 : index
    %c0_65 = arith.constant 0 : index
    %96 = vector.load %arg5[%c2_63, %c0_64, %c0_65] : memref<9x8x4xbf16, #tpu.memory_space<vmem>>, vector<1x8x4xbf16>
    %97 = vector.shape_cast %96 : vector<1x8x4xbf16> to vector<8x4xbf16>
    %cst_66 = arith.constant dense<0.000000e+00> : vector<8x128xf32>
    %98 = tpu.matmul %97, %95, %cst_66 {dimension_numbers = #tpu.dot_dimension_numbers<[1], [0], [0], [1], [0, 0, 1, 1], [], []>} : vector<8x4xbf16>, vector<4x128xbf16>, vector<8x128xf32> -> vector<8x128xf32>
    %99 = arith.addf %92, %98 : vector<8x128xf32>
    %c0_67 = arith.constant 0 : index
    %c143 = arith.constant 143 : index
    %100 = vector.load %arg13[%c0_67, %c143] : memref<4x416xbf16, #tpu.memory_space<vmem>>, vector<4x128xbf16>
    %101 = vector.broadcast %80 : vector<1x128xbf16> to vector<4x128xbf16>
    %102 = arith.mulf %100, %101 : vector<4x128xbf16>
    %c3_68 = arith.constant 3 : index
    %c0_69 = arith.constant 0 : index
    %c0_70 = arith.constant 0 : index
    %103 = vector.load %arg5[%c3_68, %c0_69, %c0_70] : memref<9x8x4xbf16, #tpu.memory_space<vmem>>, vector<1x8x4xbf16>
    %104 = vector.shape_cast %103 : vector<1x8x4xbf16> to vector<8x4xbf16>
    %cst_71 = arith.constant dense<0.000000e+00> : vector<8x128xf32>
    %105 = tpu.matmul %104, %102, %cst_71 {dimension_numbers = #tpu.dot_dimension_numbers<[1], [0], [0], [1], [0, 0, 1, 1], [], []>} : vector<8x4xbf16>, vector<4x128xbf16>, vector<8x128xf32> -> vector<8x128xf32>
    %106 = arith.addf %99, %105 : vector<8x128xf32>
    %c0_72 = arith.constant 0 : index
    %c144 = arith.constant 144 : index
    %107 = vector.load %arg13[%c0_72, %c144] : memref<4x416xbf16, #tpu.memory_space<vmem>>, vector<4x128xbf16>
    %c4_73 = arith.constant 4 : index
    %c0_74 = arith.constant 0 : index
    %c0_75 = arith.constant 0 : index
    %108 = vector.load %arg5[%c4_73, %c0_74, %c0_75] : memref<9x8x4xbf16, #tpu.memory_space<vmem>>, vector<1x8x4xbf16>
    %109 = vector.shape_cast %108 : vector<1x8x4xbf16> to vector<8x4xbf16>
    %cst_76 = arith.constant dense<0.000000e+00> : vector<8x128xf32>
    %110 = tpu.matmul %109, %107, %cst_76 {dimension_numbers = #tpu.dot_dimension_numbers<[1], [0], [0], [1], [0, 0, 1, 1], [], []>} : vector<8x4xbf16>, vector<4x128xbf16>, vector<8x128xf32> -> vector<8x128xf32>
    %111 = arith.addf %106, %110 : vector<8x128xf32>
    %c0_77 = arith.constant 0 : index
    %c145 = arith.constant 145 : index
    %112 = vector.load %arg13[%c0_77, %c145] : memref<4x416xbf16, #tpu.memory_space<vmem>>, vector<4x128xbf16>
    %113 = vector.broadcast %81 : vector<1x128xbf16> to vector<4x128xbf16>
    %114 = arith.mulf %112, %113 : vector<4x128xbf16>
    %c5_78 = arith.constant 5 : index
    %c0_79 = arith.constant 0 : index
    %c0_80 = arith.constant 0 : index
    %115 = vector.load %arg5[%c5_78, %c0_79, %c0_80] : memref<9x8x4xbf16, #tpu.memory_space<vmem>>, vector<1x8x4xbf16>
    %116 = vector.shape_cast %115 : vector<1x8x4xbf16> to vector<8x4xbf16>
    %cst_81 = arith.constant dense<0.000000e+00> : vector<8x128xf32>
    %117 = tpu.matmul %116, %114, %cst_81 {dimension_numbers = #tpu.dot_dimension_numbers<[1], [0], [0], [1], [0, 0, 1, 1], [], []>} : vector<8x4xbf16>, vector<4x128xbf16>, vector<8x128xf32> -> vector<8x128xf32>
    %118 = arith.addf %111, %117 : vector<8x128xf32>
    %c0_82 = arith.constant 0 : index
    %c159 = arith.constant 159 : index
    %119 = vector.load %arg13[%c0_82, %c159] : memref<4x416xbf16, #tpu.memory_space<vmem>>, vector<4x128xbf16>
    %120 = vector.broadcast %80 : vector<1x128xbf16> to vector<4x128xbf16>
    %121 = arith.mulf %119, %120 : vector<4x128xbf16>
    %c6_83 = arith.constant 6 : index
    %c0_84 = arith.constant 0 : index
    %c0_85 = arith.constant 0 : index
    %122 = vector.load %arg5[%c6_83, %c0_84, %c0_85] : memref<9x8x4xbf16, #tpu.memory_space<vmem>>, vector<1x8x4xbf16>
    %123 = vector.shape_cast %122 : vector<1x8x4xbf16> to vector<8x4xbf16>
    %cst_86 = arith.constant dense<0.000000e+00> : vector<8x128xf32>
    %124 = tpu.matmul %123, %121, %cst_86 {dimension_numbers = #tpu.dot_dimension_numbers<[1], [0], [0], [1], [0, 0, 1, 1], [], []>} : vector<8x4xbf16>, vector<4x128xbf16>, vector<8x128xf32> -> vector<8x128xf32>
    %125 = arith.addf %118, %124 : vector<8x128xf32>
    %c0_87 = arith.constant 0 : index
    %c160 = arith.constant 160 : index
    %126 = vector.load %arg13[%c0_87, %c160] : memref<4x416xbf16, #tpu.memory_space<vmem>>, vector<4x128xbf16>
    %c7_88 = arith.constant 7 : index
    %c0_89 = arith.constant 0 : index
    %c0_90 = arith.constant 0 : index
    %127 = vector.load %arg5[%c7_88, %c0_89, %c0_90] : memref<9x8x4xbf16, #tpu.memory_space<vmem>>, vector<1x8x4xbf16>
    %128 = vector.shape_cast %127 : vector<1x8x4xbf16> to vector<8x4xbf16>
    %cst_91 = arith.constant dense<0.000000e+00> : vector<8x128xf32>
    %129 = tpu.matmul %128, %126, %cst_91 {dimension_numbers = #tpu.dot_dimension_numbers<[1], [0], [0], [1], [0, 0, 1, 1], [], []>} : vector<8x4xbf16>, vector<4x128xbf16>, vector<8x128xf32> -> vector<8x128xf32>
    %130 = arith.addf %125, %129 : vector<8x128xf32>
    %c0_92 = arith.constant 0 : index
    %c161 = arith.constant 161 : index
    %131 = vector.load %arg13[%c0_92, %c161] : memref<4x416xbf16, #tpu.memory_space<vmem>>, vector<4x128xbf16>
    %132 = vector.broadcast %81 : vector<1x128xbf16> to vector<4x128xbf16>
    %133 = arith.mulf %131, %132 : vector<4x128xbf16>
    %c8_93 = arith.constant 8 : index
    %c0_94 = arith.constant 0 : index
    %c0_95 = arith.constant 0 : index
    %134 = vector.load %arg5[%c8_93, %c0_94, %c0_95] : memref<9x8x4xbf16, #tpu.memory_space<vmem>>, vector<1x8x4xbf16>
    %135 = vector.shape_cast %134 : vector<1x8x4xbf16> to vector<8x4xbf16>
    %cst_96 = arith.constant dense<0.000000e+00> : vector<8x128xf32>
    %136 = tpu.matmul %135, %133, %cst_96 {dimension_numbers = #tpu.dot_dimension_numbers<[1], [0], [0], [1], [0, 0, 1, 1], [], []>} : vector<8x4xbf16>, vector<4x128xbf16>, vector<8x128xf32> -> vector<8x128xf32>
    %137 = arith.addf %130, %136 : vector<8x128xf32>
    %c0_97 = arith.constant 0 : index
    %c0_98 = arith.constant 0 : index
    %138 = vector.load %arg6[%c0_97, %c0_98] : memref<8x1xf32, #tpu.memory_space<vmem>>, vector<8x1xf32>
    %139 = vector.broadcast %138 : vector<8x1xf32> to vector<8x128xf32>
    %140 = arith.addf %137, %139 : vector<8x128xf32>
    %cst_99 = arith.constant 0.000000e+00 : f32
    %141 = vector.broadcast %cst_99 : f32 to vector<8x128xf32>
    %142 = arith.maximumf %140, %141 : vector<8x128xf32>
    %c0_100 = arith.constant 0 : index
    %c128_101 = arith.constant 128 : index
    %143 = vector.load %arg12[%c0_100, %c128_101] : memref<4x416xbf16, #tpu.memory_space<vmem>>, vector<4x128xbf16>
    %c0_102 = arith.constant 0 : index
    %c0_103 = arith.constant 0 : index
    %144 = vector.load %arg7[%c0_102, %c0_103] : memref<8x4xbf16, #tpu.memory_space<vmem>>, vector<8x4xbf16>
    %cst_104 = arith.constant dense<0.000000e+00> : vector<8x128xf32>
    %145 = tpu.matmul %144, %143, %cst_104 {dimension_numbers = #tpu.dot_dimension_numbers<[1], [0], [0], [1], [0, 0, 1, 1], [], []>} : vector<8x4xbf16>, vector<4x128xbf16>, vector<8x128xf32> -> vector<8x128xf32>
    %c0_105 = arith.constant 0 : index
    %c0_106 = arith.constant 0 : index
    %146 = vector.load %arg8[%c0_105, %c0_106] : memref<8x1xf32, #tpu.memory_space<vmem>>, vector<8x1xf32>
    %147 = vector.broadcast %146 : vector<8x1xf32> to vector<8x128xf32>
    %148 = arith.addf %145, %147 : vector<8x128xf32>
    %149 = arith.addf %142, %148 : vector<8x128xf32>
    %c0_107 = arith.constant 0 : index
    %c0_108 = arith.constant 0 : index
    %c0_109 = arith.constant 0 : index
    %150 = vector.load %arg10[%c0_107, %c0_108, %c0_109] : memref<1x8x128xf32, #tpu.memory_space<vmem>>, vector<1x8x128xf32>
    %151 = vector.shape_cast %150 : vector<1x8x128xf32> to vector<8x128xf32>
    %152 = vector.shape_cast %149 : vector<8x128xf32> to vector<1x8x128xf32>
    tpu.vector_store %arg10[%c0_107, %c0_108, %c0_109], %152 {strides = array<i32>} : memref<1x8x128xf32, #tpu.memory_space<vmem>>, vector<1x8x128xf32>,
    return
  }
  func.func @transform_0(%arg0: i32, %arg1: i32) -> (i32, i32, i32) {
    %c0_i32 = arith.constant 0 : i32
    %c0_i32_0 = arith.constant 0 : i32
    %c0_i32_1 = arith.constant 0 : i32
    return %arg0, %c0_i32, %c0_i32_0 : i32, i32, i32
  }
  func.func @transform_1(%arg0: i32, %arg1: i32) -> (i32, i32, i32) {
    %c0_i32 = arith.constant 0 : i32
    %c0_i32_0 = arith.constant 0 : i32
    %c0_i32_1 = arith.constant 0 : i32
    %c0_i32_2 = arith.constant 0 : i32
    return %c0_i32, %c0_i32_0, %c0_i32_1 : i32, i32, i32
  }
  func.func @transform_2(%arg0: i32, %arg1: i32) -> (i32, i32) {
    %c0_i32 = arith.constant 0 : i32
    %c0_i32_0 = arith.constant 0 : i32
    %c0_i32_1 = arith.constant 0 : i32
    return %c0_i32, %c0_i32_0 : i32, i32
  }
  func.func @transform_3(%arg0: i32, %arg1: i32) -> (i32, i32, i32) {
    %c0_i32 = arith.constant 0 : i32
    %c0_i32_0 = arith.constant 0 : i32
    %c0_i32_1 = arith.constant 0 : i32
    %c0_i32_2 = arith.constant 0 : i32
    return %c0_i32, %c0_i32_0, %c0_i32_1 : i32, i32, i32
  }
  func.func @transform_4(%arg0: i32, %arg1: i32) -> (i32, i32) {
    %c0_i32 = arith.constant 0 : i32
    %c0_i32_0 = arith.constant 0 : i32
    %c0_i32_1 = arith.constant 0 : i32
    return %c0_i32, %c0_i32_0 : i32, i32
  }
  func.func @transform_5(%arg0: i32, %arg1: i32) -> (i32, i32) {
    %c0_i32 = arith.constant 0 : i32
    %c0_i32_0 = arith.constant 0 : i32
    %c0_i32_1 = arith.constant 0 : i32
    return %c0_i32, %c0_i32_0 : i32, i32
  }
  func.func @transform_6(%arg0: i32, %arg1: i32) -> (i32, i32) {
    %c0_i32 = arith.constant 0 : i32
    %c0_i32_0 = arith.constant 0 : i32
    %c0_i32_1 = arith.constant 0 : i32
    return %c0_i32, %c0_i32_0 : i32, i32
  }
  func.func @transform_7(%arg0: i32, %arg1: i32) -> (i32, i32) {
    %c0_i32 = arith.constant 0 : i32
    %c0_i32_0 = arith.constant 0 : i32
    %c0_i32_1 = arith.constant 0 : i32
    return %c0_i32, %c0_i32_0 : i32, i32
  }
  func.func @transform_8(%arg0: i32, %arg1: i32) -> (i32, i32, i32) {
    %c0_i32 = arith.constant 0 : i32
    %c0_i32_0 = arith.constant 0 : i32
    return %arg0, %c0_i32, %arg1 : i32, i32, i32
  }
}

</mosaic_0001>

<llo_original>
// kernel: resblock_forward.1
$region0: #{resblock_forward.1}
  #allocation0 [shape = 'u32[]', space=smem, size = 0x4, offset = 0x4, fixed_abs, tag = 'smem constant byte address 0x4 - core index']
  #allocation1 [shape = 'u32[144,128]{1,0:T(1,128)}', space=vmem, size = 0x12000, scoped, tag = 'internal scratch']
  #allocation2 [shape = 'bf16[4,896]{1,0:T(4,128)(2,1)}', space=vmem, size = 0x1c00, scoped, tag = 'scratch operand']
  #allocation3 [shape = 'bf16[4,416]{1,0:T(4,128)(2,1)}', space=vmem, size = 0x1000, scoped, tag = 'scratch operand']
  #allocation4 [shape = 'bf16[4,416]{1,0:T(4,128)(2,1)}', space=vmem, size = 0x1000, scoped, tag = 'scratch operand']
  %s0 = inlined_call_operand.vmem [shape: bf16[2,4,512], index: 0, kind: input, shape index: {}]
  %s1 = inlined_call_operand.vmem [shape: bf16[9,4,4], index: 1, kind: input, shape index: {}]
  %s2 = inlined_call_operand.vmem [shape: f32[4,1], index: 2, kind: input, shape index: {}]
  %s3 = inlined_call_operand.vmem [shape: bf16[9,8,4], index: 3, kind: input, shape index: {}]
  %s4 = inlined_call_operand.vmem [shape: f32[8,1], index: 4, kind: input, shape index: {}]
  %s5 = inlined_call_operand.vmem [shape: bf16[8,4], index: 5, kind: input, shape index: {}]
  %s6 = inlined_call_operand.vmem [shape: f32[8,1], index: 6, kind: input, shape index: {}]
  %s7 = inlined_call_operand.vmem [shape: bf16[2,160], index: 7, kind: input, shape index: {}]
  %s8 = inlined_call_operand.vmem [shape: f32[2,8,512], index: 8, kind: output, shape index: {}]
  %s9 = sld [smem:[#allocation0]]
  $region77: #{resblock_forward.1} parent=0
    _
  %s11 = ssub.s32 1, %s9
  %s12 = scalar_select 0, %s11, %s9
  loop: start=0, step=1, limit=10
  $region2: #{resblock_forward.1} parent=0 // loop_pre_header
    _
  $region3: #{resblock_forward.1} parent=0 // loop_header
    %s14 = sphi 0, %s18
    %p15 = scmp.ge.s32.totalorder %s14, 10
    %s21 = sphi 0, %s33
    %s22 = sphi 0, %s29
    %s23 = sphi 0, %s21
    %s24 = sphi 0, %s22
    %s25 = sphi 0, %s23
    %s26 = sphi 0, %s24
    %s36 = sphi 0, %s38
    %s39 = sphi 0, %s36
    %s40 = sphi 0, %s39
    %s56 = sphi 0, %s40
    %s60 = sphi 0, %s60
    %s62 = sphi 0, %s60
    %s63 = sphi 0, %s62
    %s77 = sphi 0, %s63
    %s81 = sphi 0, %s81
    %s83 = sphi 0, %s81
    %s84 = sphi 0, %s83
    %s98 = sphi 0, %s84
    %s102 = sphi 0, %s102
    %s104 = sphi 0, %s102
    %s105 = sphi 0, %s104
    %s119 = sphi 0, %s105
    %s123 = sphi 0, %s123
    %s125 = sphi 0, %s123
    %s126 = sphi 0, %s125
    %s140 = sphi 0, %s126
    %s144 = sphi 0, %s144
    %s146 = sphi 0, %s144
    %s147 = sphi 0, %s146
    %s161 = sphi 0, %s147
    %s165 = sphi 0, %s165
    %s167 = sphi 0, %s165
    %s168 = sphi 0, %s167
    %s182 = sphi 0, %s168
    %s186 = sphi 0, %s186
    %s188 = sphi 0, %s186
    %s189 = sphi 0, %s188
    %s203 = sphi 0, %s189
    %s211 = sphi 0, %s213
    %s214 = sphi 0, %s211
    %s215 = sphi 0, %s214
    %s231 = sphi 0, %s215
  $region4: #{resblock_forward.1} parent=0 // loop_header_branch
    %17 = sbr.rel (%p15) target = $region8
  $region5: #{resblock_forward.1} parent=0 // loop_body
    %s19 = ssub.s32 %s14, 1
    %s20 = ssub.s32 %s14, 2
    %s27 = sadd.s32 1, %s22
    %p28 = scmp.ge.s32.totalorder %s27, 4
    %s29 = scalar_select %p28, 0, %s27
    %s30 = sadd.s32 1, %s21
    %s31 = scalar_select %p28, %s30, %s21
    %p32 = scmp.ge.s32.totalorder %s31, 2
    %s33 = scalar_select %p32, 0, %s31
    %s34 = ssub.s32 %s21, %s33
    %p35 = scmp.eq.s32.totalorder %s34, 0
    %s37 = sadd.s32 %s36, 1
    %s38 = scalar_select %p35, %s36, %s37
    %p41 = pneg %p35
    %p42 = scmp.eq.s32.totalorder %s14, 7
    %p43 = por %p41, %p42
    %p44 = scmp.ne.s32.totalorder %s36, %s39
    %p45 = scmp.eq.s32.totalorder %s14, 0
    %p46 = por %p44, %p45
    %p47 = scmp.ne.s32.totalorder %s36, %s39
    %p48 = scmp.eq.s32.totalorder %s19, 7
    %p49 = por %p47, %p48
    %p50 = scmp.ne.s32.totalorder %s39, %s40
    %p51 = scmp.eq.s32.totalorder %s19, 0
    %p52 = por %p50, %p51
    %p53 = scmp.ne.s32.totalorder %s39, %s40
    %p54 = scmp.eq.s32.totalorder %s20, 7
    %p55 = por %p53, %p54
    %p57 = scmp.ne.s32.totalorder %s40, %s56
    %p58 = scmp.eq.s32.totalorder %s20, 0
    %p59 = por %p57, %p58
    %s61 = sadd.s32 %s60, 1
    %p64 = scmp.eq.s32.totalorder %s14, 7
    %p65 = scmp.ne.s32.totalorder %s60, %s62
    %p66 = scmp.eq.s32.totalorder %s14, 0
    %p67 = por %p65, %p66
    %p68 = scmp.ne.s32.totalorder %s60, %s62
    %p69 = scmp.eq.s32.totalorder %s19, 7
    %p70 = por %p68, %p69
    %p71 = scmp.ne.s32.totalorder %s62, %s63
    %p72 = scmp.eq.s32.totalorder %s19, 0
    %p73 = por %p71, %p72
    %p74 = scmp.ne.s32.totalorder %s62, %s63
    %p75 = scmp.eq.s32.totalorder %s20, 7
    %p76 = por %p74, %p75
    %p78 = scmp.ne.s32.totalorder %s63, %s77
    %p79 = scmp.eq.s32.totalorder %s20, 0
    %p80 = por %p78, %p79
    %s82 = sadd.s32 %s81, 1
    %p85 = scmp.eq.s32.totalorder %s14, 7
    %p86 = scmp.ne.s32.totalorder %s81, %s83
    %p87 = scmp.eq.s32.totalorder %s14, 0
    %p88 = por %p86, %p87
    %p89 = scmp.ne.s32.totalorder %s81, %s83
    %p90 = scmp.eq.s32.totalorder %s19, 7
    %p91 = por %p89, %p90
    %p92 = scmp.ne.s32.totalorder %s83, %s84
    %p93 = scmp.eq.s32.totalorder %s19, 0
    %p94 = por %p92, %p93
    %p95 = scmp.ne.s32.totalorder %s83, %s84
    %p96 = scmp.eq.s32.totalorder %s20, 7
    %p97 = por %p95, %p96
    %p99 = scmp.ne.s32.totalorder %s84, %s98
    %p100 = scmp.eq.s32.totalorder %s20, 0
    %p101 = por %p99, %p100
    %s103 = sadd.s32 %s102, 1
    %p106 = scmp.eq.s32.totalorder %s14, 7
    %p107 = scmp.ne.s32.totalorder %s102, %s104
    %p108 = scmp.eq.s32.totalorder %s14, 0
    %p109 = por %p107, %p108
    %p110 = scmp.ne.s32.totalorder %s102, %s104
    %p111 = scmp.eq.s32.totalorder %s19, 7
    %p112 = por %p110, %p111
    %p113 = scmp.ne.s32.totalorder %s104, %s105
    %p114 = scmp.eq.s32.totalorder %s19, 0
    %p115 = por %p113, %p114
    %p116 = scmp.ne.s32.totalorder %s104, %s105
    %p117 = scmp.eq.s32.totalorder %s20, 7
    %p118 = por %p116, %p117
    %p120 = scmp.ne.s32.totalorder %s105, %s119
    %p121 = scmp.eq.s32.totalorder %s20, 0
    %p122 = por %p120, %p121
    %s124 = sadd.s32 %s123, 1
    %p127 = scmp.eq.s32.totalorder %s14, 7
    %p128 = scmp.ne.s32.totalorder %s123, %s125
    %p129 = scmp.eq.s32.totalorder %s14, 0
    %p130 = por %p128, %p129
    %p131 = scmp.ne.s32.totalorder %s123, %s125
    %p132 = scmp.eq.s32.totalorder %s19, 7
    %p133 = por %p131, %p132
    %p134 = scmp.ne.s32.totalorder %s125, %s126
    %p135 = scmp.eq.s32.totalorder %s19, 0
    %p136 = por %p134, %p135
    %p137 = scmp.ne.s32.totalorder %s125, %s126
    %p138 = scmp.eq.s32.totalorder %s20, 7
    %p139 = por %p137, %p138
    %p141 = scmp.ne.s32.totalorder %s126, %s140
    %p142 = scmp.eq.s32.totalorder %s20, 0
    %p143 = por %p141, %p142
    %s145 = sadd.s32 %s144, 1
    %p148 = scmp.eq.s32.totalorder %s14, 7
    %p149 = scmp.ne.s32.totalorder %s144, %s146
    %p150 = scmp.eq.s32.totalorder %s14, 0
    %p151 = por %p149, %p150
    %p152 = scmp.ne.s32.totalorder %s144, %s146
    %p153 = scmp.eq.s32.totalorder %s19, 7
    %p154 = por %p152, %p153
    %p155 = scmp.ne.s32.totalorder %s146, %s147
    %p156 = scmp.eq.s32.totalorder %s19, 0
    %p157 = por %p155, %p156
    %p158 = scmp.ne.s32.totalorder %s146, %s147
    %p159 = scmp.eq.s32.totalorder %s20, 7
    %p160 = por %p158, %p159
    %p162 = scmp.ne.s32.totalorder %s147, %s161
    %p163 = scmp.eq.s32.totalorder %s20, 0
    %p164 = por %p162, %p163
    %s166 = sadd.s32 %s165, 1
    %p169 = scmp.eq.s32.totalorder %s14, 7
    %p170 = scmp.ne.s32.totalorder %s165, %s167
    %p171 = scmp.eq.s32.totalorder %s14, 0
    %p172 = por %p170, %p171
    %p173 = scmp.ne.s32.totalorder %s165, %s167
    %p174 = scmp.eq.s32.totalorder %s19, 7
    %p175 = por %p173, %p174
    %p176 = scmp.ne.s32.totalorder %s167, %s168
    %p177 = scmp.eq.s32.totalorder %s19, 0
    %p178 = por %p176, %p177
    %p179 = scmp.ne.s32.totalorder %s167, %s168
    %p180 = scmp.eq.s32.totalorder %s20, 7
    %p181 = por %p179, %p180
    %p183 = scmp.ne.s32.totalorder %s168, %s182
    %p184 = scmp.eq.s32.totalorder %s20, 0
    %p185 = por %p183, %p184
    %s187 = sadd.s32 %s186, 1
    %p190 = scmp.eq.s32.totalorder %s14, 7
    %p191 = scmp.ne.s32.totalorder %s186, %s188
    %p192 = scmp.eq.s32.totalorder %s14, 0
    %p193 = por %p191, %p192
    %p194 = scmp.ne.s32.totalorder %s186, %s188
    %p195 = scmp.eq.s32.totalorder %s19, 7
    %p196 = por %p194, %p195
    %p197 = scmp.ne.s32.totalorder %s188, %s189
    %p198 = scmp.eq.s32.totalorder %s19, 0
    %p199 = por %p197, %p198
    %p200 = scmp.ne.s32.totalorder %s188, %s189
    %p201 = scmp.eq.s32.totalorder %s20, 7
    %p202 = por %p200, %p201
    %p204 = scmp.ne.s32.totalorder %s189, %s203
    %p205 = scmp.eq.s32.totalorder %s20, 0
    %p206 = por %p204, %p205
    %s207 = ssub.s32 %s21, %s33
    %s208 = ssub.s32 %s22, %s29
    %s209 = sor.u32 %s207, %s208
    %p210 = scmp.eq.s32.totalorder %s209, 0
    %s212 = sadd.s32 %s211, 1
    %s213 = scalar_select %p210, %s211, %s212
    %p216 = pneg %p210
    %p217 = scmp.eq.s32.totalorder %s14, 7
    %p218 = por %p216, %p217
    %p219 = scmp.ne.s32.totalorder %s211, %s214
    %p220 = scmp.eq.s32.totalorder %s14, 0
    %p221 = por %p219, %p220
    %p222 = scmp.ne.s32.totalorder %s211, %s214
    %p223 = scmp.eq.s32.totalorder %s19, 7
    %p224 = por %p222, %p223
    %p225 = scmp.ne.s32.totalorder %s214, %s215
    %p226 = scmp.eq.s32.totalorder %s19, 0
    %p227 = por %p225, %p226
    %p228 = scmp.ne.s32.totalorder %s214, %s215
    %p229 = scmp.eq.s32.totalorder %s20, 7
    %p230 = por %p228, %p229
    %p232 = scmp.ne.s32.totalorder %s215, %s231
    %p233 = scmp.eq.s32.totalorder %s20, 0
    %p234 = por %p232, %p233
    %p235 = scmp.le.s32.totalorder 1, %s14
    %p236 = scmp.lt.s32.totalorder %s14, 9
    %p237 = pnand %p235, %p236
    %p238 = pneg %p237
    // Predicated region
    $region9: #{resblock_forward.1} parent=5 // pred_check
      _
    $region10: #{resblock_forward.1} parent=5 // pred_check_branch
      %240 = sbr.rel (%p237) target = $region12
    $region11: #{resblock_forward.1} parent=5 // pred_region
      %s241 = ssub.s32 %s14, 1
      // Predicated region
      $region13: #{resblock_forward.1} parent=11 // pred_check
        %p242 = pneg %p73
      $region14: #{resblock_forward.1} parent=11 // pred_check_branch
        %244 = sbr.rel (%p242) target = $region16
      $region15: #{resblock_forward.1} parent=11 // pred_region
        _
      $region16: #{resblock_forward.1} parent=11 // pred_fallthru
        _
      // Predicated region
      $region17: #{resblock_forward.1} parent=11 // pred_check
        %p245 = pneg %p94
      $region18: #{resblock_forward.1} parent=11 // pred_check_branch
        %247 = sbr.rel (%p245) target = $region20
      $region19: #{resblock_forward.1} parent=11 // pred_region
        _
      $region20: #{resblock_forward.1} parent=11 // pred_fallthru
        _
      // Predicated region
      $region21: #{resblock_forward.1} parent=11 // pred_check
        %p248 = pneg %p115
      $region22: #{resblock_forward.1} parent=11 // pred_check_branch
        %250 = sbr.rel (%p248) target = $region24
      $region23: #{resblock_forward.1} parent=11 // pred_region
        _
      $region24: #{resblock_forward.1} parent=11 // pred_fallthru
        _
      // Predicated region
      $region25: #{resblock_forward.1} parent=11 // pred_check
        %p251 = pneg %p136
      $region26: #{resblock_forward.1} parent=11 // pred_check_branch
        %253 = sbr.rel (%p251) target = $region28
      $region27: #{resblock_forward.1} parent=11 // pred_region
        _
      $region28: #{resblock_forward.1} parent=11 // pred_fallthru
        _
      // Predicated region
      $region29: #{resblock_forward.1} parent=11 // pred_check
        %p254 = pneg %p157
      $region30: #{resblock_forward.1} parent=11 // pred_check_branch
        %256 = sbr.rel (%p254) target = $region32
      $region31: #{resblock_forward.1} parent=11 // pred_region
        _
      $region32: #{resblock_forward.1} parent=11 // pred_fallthru
        _
      // Predicated region
      $region33: #{resblock_forward.1} parent=11 // pred_check
        %p257 = pneg %p178
      $region34: #{resblock_forward.1} parent=11 // pred_check_branch
        %259 = sbr.rel (%p257) target = $region36
      $region35: #{resblock_forward.1} parent=11 // pred_region
        _
      $region36: #{resblock_forward.1} parent=11 // pred_fallthru
        _
      // Predicated region
      $region37: #{resblock_forward.1} parent=11 // pred_check
        %p260 = pneg %p199
      $region38: #{resblock_forward.1} parent=11 // pred_check_branch
        %262 = sbr.rel (%p260) target = $region40
      $region39: #{resblock_forward.1} parent=11 // pred_region
        _
      $region40: #{resblock_forward.1} parent=11 // pred_fallthru
        _
    $region12: #{resblock_forward.1} parent=5 // pred_fallthru
      _
    %p263 = scmp.lt.s32.totalorder %s14, 8
    // Predicated region
    $region41: #{resblock_forward.1} parent=5 // pred_check
      %p264 = pneg %p263
    $region42: #{resblock_forward.1} parent=5 // pred_check_branch
      %266 = sbr.rel (%p264) target = $region44
    $region43: #{resblock_forward.1} parent=5 // pred_region
      // Predicated region
      $region45: #{resblock_forward.1} parent=43 // pred_check
        %p267 = pneg %p46
      $region46: #{resblock_forward.1} parent=43 // pred_check_branch
        %269 = sbr.rel (%p267) target = $region48
      $region47: #{resblock_forward.1} parent=43 // pred_region
        %p270 = scmp.lt.s32.totalorder %s21, 1
        %s271 = scalar_select %p270, %s21, 1
        %s272 = smul.addr %s271, 4
        %s273 = smul.addr %s272, 2
        %s274 = scalar_lea.vmem %s0, %s273
      $region48: #{resblock_forward.1} parent=43 // pred_fallthru
        _
    $region44: #{resblock_forward.1} parent=5 // pred_fallthru
      _
    %p275 = scmp.le.s32.totalorder 1, %s14
    %p276 = scmp.lt.s32.totalorder %s14, 9
    %p277 = pnand %p275, %p276
    %p278 = pneg %p277
    // Predicated region
    $region49: #{resblock_forward.1} parent=5 // pred_check
      _
    $region50: #{resblock_forward.1} parent=5 // pred_check_branch
      %280 = sbr.rel (%p277) target = $region52
    $region51: #{resblock_forward.1} parent=5 // pred_region
      %s281 = ssub.s32 %s14, 1
      %p282 = scmp.lt.s32.totalorder %s23, 1
      %s283 = scalar_select %p282, %s23, 1
      %s284 = smul.addr %s283, 4
      %s285 = smul.addr %s284, 2
      %s286 = scalar_lea.vmem %s0, %s285
      %p287 = pneg %p52
      %p288 = pneg %p49
      %p289 = pneg %p73
      %p290 = pneg %p70
      %p291 = pneg %p94
      %p292 = pneg %p91
      %p293 = pneg %p115
      %p294 = pneg %p112
      %p295 = pneg %p136
      %p296 = pneg %p133
      %p297 = pneg %p157
      %p298 = pneg %p154
      %p299 = pneg %p178
      %p300 = pneg %p175
      %p301 = pneg %p199
      %p302 = pneg %p196
      %p303 = pneg %p227
      %p304 = pneg %p224
      %p305 = scmp.lt.s32.totalorder %s23, 1
      %s306 = scalar_select %p305, %s23, 1
      %p307 = scmp.lt.s32.totalorder %s24, 3
      %s308 = scalar_select %p307, %s24, 3
      %s309 = smul.addr %s306, 4
      %s310 = sadd.s32 %s308, %s309
      %s311 = smul.addr %s310, 8
      %s312 = scalar_lea.vmem %s8, %s311
      %p313 = scmp.lt.s32.totalorder %s23, 1
      %s314 = scalar_select %p313, %s23, 1
      %s315 = smul.addr %s314, 4
      %s316 = smul.addr %s315, 2
      %s317 = scalar_lea.vmem %s0, %s316
      %p318 = scmp.lt.s32.totalorder %s23, 1
      %s319 = scalar_select %p318, %s23, 1
      %p320 = scmp.lt.s32.totalorder %s24, 3
      %s321 = scalar_select %p320, %s24, 3
      %s322 = smul.addr %s319, 4
      %s323 = sadd.s32 %s321, %s322
      %s324 = smul.addr %s323, 8
      %s325 = scalar_lea.vmem %s8, %s324
      %p327 = scmp.eq.s32.totalorder %s24, 0
      // Predicated region
      $region53: #{resblock_forward.1} parent=51 // pred_check
        %p328 = pneg %p327
      $region54: #{resblock_forward.1} parent=51 // pred_check_branch
        %330 = sbr.rel (%p328) target = $region56
      $region55: #{resblock_forward.1} parent=51 // pred_region
        %331 = vst [vmem:[#allocation2] sm:$0x3] 0
        %332 = vst [vmem:[#allocation2 + $0xa] sm:$0x3] 0
        %333 = vst [vmem:[#allocation2 + $0xc] sm:$0x3] 0
        %v334 = vld [vmem:[%s317] sm:$0xff]
        %335 = vst [vmem:[#allocation2 + $0x2] sm:$0xff] %v334
        %336 = vst [vmem:[#allocation4] sm:$0x3] 0
        %vm337 = vcmask 1041664
        %vm338 = vcmask 257026
        %vm339 = vmor %vm338, %vm337
        %340 = vst.msk [vmem:[#allocation4 + $0x4] sm:$0xf] %vm339, 0
      $region56: #{resblock_forward.1} parent=51 // pred_fallthru
        _
      %s341 = smul.u32 %s24, 128
      %s342 = sshra.s32 %s341, 7
      %s343 = sand.u32 %s341, 127
      %s344 = smul.addr %s342, 2
      %s345 = scalar_lea.vmem [#allocation2], %s344
      %v346 = vld [vmem:[%s345] sm:$0xff]
      %vm347 = vcmask 1041408
      %vm348 = vcmask 1043458
      %vm349 = vmor %vm348, %vm347
      %vm350 = vcmask 1045508
      %vm351 = vmor %vm350, %vm349
      %vm352 = vcmask 261126
      %vm353 = vmor %vm352, %vm351
      %354 = vst.msk [vmem:[#allocation3] sm:$0xff] %vm353, %v346
      %v355 = vld [vmem:[%s7] sm:$0x3]
      %v356 = vld [vmem:[#allocation3] sm:$0xf]
      %v359 = vunpack.c.l.s4 1966171168
      %v360 = vunpack.c.0.s8 %v359
      %v361 = vlaneseq
      %v362 = vshrl.u32 %v361, 7
      %v363 = vsub.s32 %v360, %v362
      %v364 = vrot.slane %v355, %v363
      %v365 = vcombine.high %v364, %v364
      %v367 = vunpack.c.l.s4 1966171168
      %v368 = vunpack.c.0.s8 %v367
      %v369 = vlaneseq
      %v370 = vshrl.u32 %v369, 7
      %v371 = vsub.s32 %v368, %v370
      %v372 = vrot.slane %v364, %v371
      %v374 = vunpack.c.l.s4 1966171168
      %v375 = vunpack.c.0.s8 %v374
      %v376 = vlaneseq
      %v377 = vshrl.u32 %v376, 7
      %v378 = vsub.s32 %v375, %v377
      %v379 = vrot.slane %v365, %v378
      %v381 = vpack.i.b16 %v372, %v372
      %v383 = vlaneseq
      %v384 = vshrl.u32 %v383, 7
      %v385 = vsub.s32 0, %v384
      %v386 = vrot.slane %v381, %v385
      %v388 = vpack.i.b16 %v379, %v379
      %v390 = vlaneseq
      %v391 = vshrl.u32 %v390, 7
      %v392 = vsub.s32 0, %v391
      %v393 = vrot.slane %v388, %v392
      %v396 = vcombine.low %v386, %v393
      %v398 = vunpack.c.l.s4 1983009808
      %v399 = vunpack.c.0.s8 %v398
      %v400 = vlaneseq
      %v401 = vshrl.u32 %v400, 7
      %v402 = vsub.s32 %v399, %v401
      %v403 = vrot.slane %v396, %v402
      %404 = vrot.lane.b32.xlu0 %v403, 95
      %v405 = vpop.permute.xlu0 %404
      %v406 = vrot.slane %v405, 6
      %vm407 = vcmask 777216
      %v408 = vsel %vm407, %v406, %v405
      %v410 = vmul.bf16 %v356, %v408
      %v411 = vld [vmem:[%s1] sm:$0x3]
      %s412 = scalar_lea.vmem %s1, 2
      %v413 = vld [vmem:[%s412] sm:$0x3]
      %v416 = vunpack.c.l.s4 1983009808
      %v417 = vunpack.c.0.s8 %v416
      %v418 = vlaneseq
      %v419 = vshrl.u32 %v418, 7
      %v420 = vsub.s32 %v417, %v419
      %v421 = vrot.slane %v356, %v420
      %v422 = vcombine.high %v421, %v421
      %423 = vrot.lane.b32.xlu0 %v421, 32
      %v424 = vpop.permute.xlu0 %423
      %425 = vrot.lane.b32.xlu0 %v422, 32
      %v426 = vpop.permute.xlu0 %425
      %vm427 = vcmask 261120
      %v428 = vsel %vm427, %v424, %v426
      %vm429 = vcmask 31744
      %v431 = vsel %vm429, %v413, 0
      %v434 = vsel %vm347, %v428, 0
      %v437 = vsel %vm347, %v426, 0
      %439 = vmatprep.subr.bf16.mxu0 0
      %440 = vmatpush1.bf16.msra.mxu0 0
      %441 = vmatprep.subr.bf16.mxu0 0
      %442 = vmatpush1.bf16.msra.mxu0 0
      %443 = vmatprep.subr.bf16.mxu0 0
      %444 = vmatpush1.bf16.msra.mxu0 0
      %445 = vmatprep.subr.bf16.mxu0 0
      %446 = vmatpush1.bf16.msra.mxu0 0
      %447 = vmatprep.subr.bf16.mxu0 0
      %448 = vmatpush1.bf16.msra.mxu0 0
      %449 = vmatprep.subr.bf16.mxu0 0
      %450 = vmatpush1.bf16.msra.mxu0 0
      %451 = vmatprep.subr.bf16.mxu0 0
      %452 = vmatpush1.bf16.msra.mxu0 0
      %453 = vmatprep.subr.bf16.mxu0 %v437
      %454 = vmatpush1.bf16.msra.mxu0 %v434
      %455 = vmatprep.subr.bf16.mxu0 0
      %456 = vmatpush2.bf16.msra.mxu0 0
      %457 = vmatprep.subr.bf16.mxu0 0
      %458 = vmatpush2.bf16.msra.mxu0 0
      %459 = vmatprep.subr.bf16.mxu0 0
      %460 = vmatpush2.bf16.msra.mxu0 0
      %461 = vmatprep.subr.bf16.mxu0 0
      %462 = vmatpush2.bf16.msra.mxu0 0
      %463 = vmatprep.subr.bf16.mxu0 0
      %464 = vmatpush2.bf16.msra.mxu0 0
      %465 = vmatprep.subr.bf16.mxu0 0
      %466 = vmatpush2.bf16.msra.mxu0 0
      %467 = vmatprep.subr.bf16.mxu0 0
      %468 = vmatpush2.bf16.msra.mxu0 0
      %469 = vmatprep.subr.bf16.mxu0 0
      %470 = vmatpush2.bf16.msra.mxu0 0
      %471 = vmatprep.mubr.bf16.mxu0 0
      %472 = vmatmul.mubr.bf16.gmra.mxu0 %v431
      %v473 = vpop.f32.mrf.mxu0
      %v474 = vadd.f32 0.0, %v473
      %v475 = vpop.f32.mrf.mxu0
      %v476 = vadd.f32 0.0, %v475
      %v477 = vpop.f32.mrf.mxu0
      %v478 = vpop.f32.mrf.mxu0
      %479 = vdwg.mxu0
      %v482 = vunpack.c.l.s4 1983009808
      %v483 = vunpack.c.0.s8 %v482
      %v484 = vlaneseq
      %v485 = vshrl.u32 %v484, 7
      %v486 = vsub.s32 %v483, %v485
      %v487 = vrot.slane %v410, %v486
      %v488 = vcombine.high %v487, %v487
      %489 = vrot.lane.b32.xlu0 %v487, 33
      %v490 = vpop.permute.xlu0 %489
      %491 = vrot.lane.b32.xlu0 %v488, 33
      %v492 = vpop.permute.xlu0 %491
      %vm493 = vcmask 269312
      %v494 = vsel %vm493, %v490, %v492
      %v496 = vsel %vm429, %v411, 0
      %v499 = vsel %vm347, %v494, 0
      %v502 = vsel %vm347, %v492, 0
      %504 = vmatprep.subr.bf16.mxu0 0
      %505 = vmatpush1.bf16.msra.mxu0 0
      %506 = vmatprep.subr.bf16.mxu0 0
      %507 = vmatpush1.bf16.msra.mxu0 0
      %508 = vmatprep.subr.bf16.mxu0 0
      %509 = vmatpush1.bf16.msra.mxu0 0
      %510 = vmatprep.subr.bf16.mxu0 0
      %511 = vmatpush1.bf16.msra.mxu0 0
      %512 = vmatprep.subr.bf16.mxu0 0
      %513 = vmatpush1.bf16.msra.mxu0 0
      %514 = vmatprep.subr.bf16.mxu0 0
      %515 = vmatpush1.bf16.msra.mxu0 0
      %516 = vmatprep.subr.bf16.mxu0 0
      %517 = vmatpush1.bf16.msra.mxu0 0
      %518 = vmatprep.subr.bf16.mxu0 %v502
      %519 = vmatpush1.bf16.msra.mxu0 %v499
      %520 = vmatprep.subr.bf16.mxu0 0
      %521 = vmatpush2.bf16.msra.mxu0 0
      %522 = vmatprep.subr.bf16.mxu0 0
      %523 = vmatpush2.bf16.msra.mxu0 0
      %524 = vmatprep.subr.bf16.mxu0 0
      %525 = vmatpush2.bf16.msra.mxu0 0
      %526 = vmatprep.subr.bf16.mxu0 0
      %527 = vmatpush2.bf16.msra.mxu0 0
      %528 = vmatprep.subr.bf16.mxu0 0
      %529 = vmatpush2.bf16.msra.mxu0 0
      %530 = vmatprep.subr.bf16.mxu0 0
      %531 = vmatpush2.bf16.msra.mxu0 0
      %532 = vmatprep.subr.bf16.mxu0 0
      %533 = vmatpush2.bf16.msra.mxu0 0
      %534 = vmatprep.subr.bf16.mxu0 0
      %535 = vmatpush2.bf16.msra.mxu0 0
      %536 = vmatprep.mubr.bf16.mxu0 0
      %537 = vmatmul.mubr.bf16.gmra.mxu0 %v496
      %v538 = vpop.f32.mrf.mxu0
      %v539 = vadd.f32 %v474, %v538
      %v540 = vpop.f32.mrf.mxu0
      %v541 = vadd.f32 %v476, %v540
      %v542 = vpop.f32.mrf.mxu0
      %v543 = vpop.f32.mrf.mxu0
      %544 = vdwg.mxu0
      %v545 = vld [vmem:[#allocation3] sm:$0x3f]
      %v546 = vshrl.u32 %v372, 16
      %v547 = vpack.i.b16 %v546, %v546
      %v549 = vlaneseq
      %v550 = vshrl.u32 %v549, 7
      %v551 = vsub.s32 0, %v550
      %v552 = vrot.slane %v547, %v551
      %v553 = vshrl.u32 %v379, 16
      %v554 = vpack.i.b16 %v553, %v553
      %v556 = vlaneseq
      %v557 = vshrl.u32 %v556, 7
      %v558 = vsub.s32 0, %v557
      %v559 = vrot.slane %v554, %v558
      %v562 = vcombine.low %v552, %v559
      %v564 = vunpack.c.l.s4 1983009808
      %v565 = vunpack.c.0.s8 %v564
      %v566 = vlaneseq
      %v567 = vshrl.u32 %v566, 7
      %v568 = vsub.s32 %v565, %v567
      %v569 = vrot.slane %v562, %v568
      %570 = vrot.lane.b32.xlu0 %v569, 97
      %v571 = vpop.permute.xlu0 %570
      %v572 = vrot.slane %v571, 6
      %vm573 = vcmask 793600
      %v574 = vsel %vm573, %v572, %v571
      %v576 = vmul.bf16 %v545, %v574
      %s577 = scalar_lea.vmem %s1, 4
      %v578 = vld [vmem:[%s577] sm:$0x3]
      %v580 = vcombine.high %v576, %v576
      %v582 = vunpack.c.l.s4 1983009808
      %v583 = vunpack.c.0.s8 %v582
      %v584 = vlaneseq
      %v585 = vshrl.u32 %v584, 7
      %v586 = vsub.s32 %v583, %v585
      %v587 = vrot.slane %v576, %v586
      %v589 = vunpack.c.l.s4 1983009808
      %v590 = vunpack.c.0.s8 %v589
      %v591 = vlaneseq
      %v592 = vshrl.u32 %v591, 7
      %v593 = vsub.s32 %v590, %v592
      %v594 = vrot.slane %v580, %v593
      %v595 = vcombine.high %v587, %v587
      %596 = vrot.lane.b32.xlu0 %v587, 31
      %v597 = vpop.permute.xlu0 %596
      %598 = vrot.lane.b32.xlu0 %v595, 31
      %v599 = vpop.permute.xlu0 %598
      %600 = vrot.lane.b32.xlu0 %v594, 31
      %v601 = vpop.permute.xlu0 %600
      %vm602 = vcmask 252928
      %v603 = vsel %vm602, %v597, %v599
      %v604 = vsel %vm602, %v599, %v601
      %v606 = vsel %vm429, %v578, 0
      %v609 = vsel %vm347, %v603, 0
      %v612 = vsel %vm347, %v604, 0
      %614 = vmatprep.subr.bf16.mxu0 0
      %615 = vmatpush1.bf16.msra.mxu0 0
      %616 = vmatprep.subr.bf16.mxu0 0
      %617 = vmatpush1.bf16.msra.mxu0 0
      %618 = vmatprep.subr.bf16.mxu0 0
      %619 = vmatpush1.bf16.msra.mxu0 0
      %620 = vmatprep.subr.bf16.mxu0 0
      %621 = vmatpush1.bf16.msra.mxu0 0
      %622 = vmatprep.subr.bf16.mxu0 0
      %623 = vmatpush1.bf16.msra.mxu0 0
      %624 = vmatprep.subr.bf16.mxu0 0
      %625 = vmatpush1.bf16.msra.mxu0 0
      %626 = vmatprep.subr.bf16.mxu0 0
      %627 = vmatpush1.bf16.msra.mxu0 0
      %628 = vmatprep.subr.bf16.mxu0 %v612
      %629 = vmatpush1.bf16.msra.mxu0 %v609
      %630 = vmatprep.subr.bf16.mxu0 0
      %631 = vmatpush2.bf16.msra.mxu0 0
      %632 = vmatprep.subr.bf16.mxu0 0
      %633 = vmatpush2.bf16.msra.mxu0 0
      %634 = vmatprep.subr.bf16.mxu0 0
      %635 = vmatpush2.bf16.msra.mxu0 0
      %636 = vmatprep.subr.bf16.mxu0 0
      %637 = vmatpush2.bf16.msra.mxu0 0
      %638 = vmatprep.subr.bf16.mxu0 0
      %639 = vmatpush2.bf16.msra.mxu0 0
      %640 = vmatprep.subr.bf16.mxu0 0
      %641 = vmatpush2.bf16.msra.mxu0 0
      %642 = vmatprep.subr.bf16.mxu0 0
      %643 = vmatpush2.bf16.msra.mxu0 0
      %644 = vmatprep.subr.bf16.mxu0 0
      %645 = vmatpush2.bf16.msra.mxu0 0
      %646 = vmatprep.mubr.bf16.mxu0 0
      %647 = vmatmul.mubr.bf16.gmra.mxu0 %v606
      %v648 = vpop.f32.mrf.mxu0
      %v649 = vadd.f32 0.0, %v648
      %v650 = vpop.f32.mrf.mxu0
      %v651 = vadd.f32 0.0, %v650
      %v652 = vpop.f32.mrf.mxu0
      %v653 = vpop.f32.mrf.mxu0
      %654 = vdwg.mxu0
      %v655 = vadd.f32 %v539, %v649
      %v656 = vadd.f32 %v541, %v651
      %v657 = vld [vmem:[#allocation3] sm:$0x3f]
      %658 = vrot.lane.b32.xlu0 %v403, 111
      %v659 = vpop.permute.xlu0 %658
      %v660 = vrot.slane %v659, 6
      %vm661 = vcmask 908288
      %v662 = vsel %vm661, %v660, %v659
      %v664 = vmul.bf16 %v657, %v662
      %s665 = scalar_lea.vmem %s1, 6
      %v666 = vld [vmem:[%s665] sm:$0x3]
      %v668 = vcombine.high %v664, %v664
      %v670 = vunpack.c.l.s4 1983009808
      %v671 = vunpack.c.0.s8 %v670
      %v672 = vlaneseq
      %v673 = vshrl.u32 %v672, 7
      %v674 = vsub.s32 %v671, %v673
      %v675 = vrot.slane %v664, %v674
      %v677 = vunpack.c.l.s4 1983009808
      %v678 = vunpack.c.0.s8 %v677
      %v679 = vlaneseq
      %v680 = vshrl.u32 %v679, 7
      %v681 = vsub.s32 %v678, %v680
      %v682 = vrot.slane %v668, %v681
      %v683 = vcombine.high %v675, %v675
      %684 = vrot.lane.b32.xlu0 %v675, 17
      %v685 = vpop.permute.xlu0 %684
      %686 = vrot.lane.b32.xlu0 %v683, 17
      %v687 = vpop.permute.xlu0 %686
      %688 = vrot.lane.b32.xlu0 %v682, 17
      %v689 = vpop.permute.xlu0 %688
      %vm690 = vcmask 138240
      %v691 = vsel %vm690, %v685, %v687
      %v692 = vsel %vm690, %v687, %v689
      %v694 = vsel %vm429, %v666, 0
      %v697 = vsel %vm347, %v691, 0
      %v700 = vsel %vm347, %v692, 0
      %702 = vmatprep.subr.bf16.mxu0 0
      %703 = vmatpush1.bf16.msra.mxu0 0
      %704 = vmatprep.subr.bf16.mxu0 0
      %705 = vmatpush1.bf16.msra.mxu0 0
      %706 = vmatprep.subr.bf16.mxu0 0
      %707 = vmatpush1.bf16.msra.mxu0 0
      %708 = vmatprep.subr.bf16.mxu0 0
      %709 = vmatpush1.bf16.msra.mxu0 0
      %710 = vmatprep.subr.bf16.mxu0 0
      %711 = vmatpush1.bf16.msra.mxu0 0
      %712 = vmatprep.subr.bf16.mxu0 0
      %713 = vmatpush1.bf16.msra.mxu0 0
      %714 = vmatprep.subr.bf16.mxu0 0
      %715 = vmatpush1.bf16.msra.mxu0 0
      %716 = vmatprep.subr.bf16.mxu0 %v700
      %717 = vmatpush1.bf16.msra.mxu0 %v697
      %718 = vmatprep.subr.bf16.mxu0 0
      %719 = vmatpush2.bf16.msra.mxu0 0
      %720 = vmatprep.subr.bf16.mxu0 0
      %721 = vmatpush2.bf16.msra.mxu0 0
      %722 = vmatprep.subr.bf16.mxu0 0
      %723 = vmatpush2.bf16.msra.mxu0 0
      %724 = vmatprep.subr.bf16.mxu0 0
      %725 = vmatpush2.bf16.msra.mxu0 0
      %726 = vmatprep.subr.bf16.mxu0 0
      %727 = vmatpush2.bf16.msra.mxu0 0
      %728 = vmatprep.subr.bf16.mxu0 0
      %729 = vmatpush2.bf16.msra.mxu0 0
      %730 = vmatprep.subr.bf16.mxu0 0
      %731 = vmatpush2.bf16.msra.mxu0 0
      %732 = vmatprep.subr.bf16.mxu0 0
      %733 = vmatpush2.bf16.msra.mxu0 0
      %734 = vmatprep.mubr.bf16.mxu0 0
      %735 = vmatmul.mubr.bf16.gmra.mxu0 %v694
      %v736 = vpop.f32.mrf.mxu0
      %v737 = vadd.f32 0.0, %v736
      %v738 = vpop.f32.mrf.mxu0
      %v739 = vadd.f32 0.0, %v738
      %v740 = vpop.f32.mrf.mxu0
      %v741 = vpop.f32.mrf.mxu0
      %742 = vdwg.mxu0
      %v743 = vadd.f32 %v655, %v737
      %v744 = vadd.f32 %v656, %v739
      %v745 = vld [vmem:[#allocation3] sm:$0x3f]
      %s746 = scalar_lea.vmem %s1, 8
      %v747 = vld [vmem:[%s746] sm:$0x3]
      %v749 = vcombine.high %v745, %v745
      %v751 = vunpack.c.l.s4 1983009808
      %v752 = vunpack.c.0.s8 %v751
      %v753 = vlaneseq
      %v754 = vshrl.u32 %v753, 7
      %v755 = vsub.s32 %v752, %v754
      %v756 = vrot.slane %v745, %v755
      %v758 = vunpack.c.l.s4 1983009808
      %v759 = vunpack.c.0.s8 %v758
      %v760 = vlaneseq
      %v761 = vshrl.u32 %v760, 7
      %v762 = vsub.s32 %v759, %v761
      %v763 = vrot.slane %v749, %v762
      %v764 = vcombine.high %v756, %v756
      %765 = vrot.lane.b32.xlu0 %v756, 16
      %v766 = vpop.permute.xlu0 %765
      %767 = vrot.lane.b32.xlu0 %v764, 16
      %v768 = vpop.permute.xlu0 %767
      %769 = vrot.lane.b32.xlu0 %v763, 16
      %v770 = vpop.permute.xlu0 %769
      %vm771 = vcmask 130048
      %v772 = vsel %vm771, %v766, %v768
      %v773 = vsel %vm771, %v768, %v770
      %v775 = vsel %vm429, %v747, 0
      %v778 = vsel %vm347, %v772, 0
      %v781 = vsel %vm347, %v773, 0
      %783 = vmatprep.subr.bf16.mxu0 0
      %784 = vmatpush1.bf16.msra.mxu0 0
      %785 = vmatprep.subr.bf16.mxu0 0
      %786 = vmatpush1.bf16.msra.mxu0 0
      %787 = vmatprep.subr.bf16.mxu0 0
      %788 = vmatpush1.bf16.msra.mxu0 0
      %789 = vmatprep.subr.bf16.mxu0 0
      %790 = vmatpush1.bf16.msra.mxu0 0
      %791 = vmatprep.subr.bf16.mxu0 0
      %792 = vmatpush1.bf16.msra.mxu0 0
      %793 = vmatprep.subr.bf16.mxu0 0
      %794 = vmatpush1.bf16.msra.mxu0 0
      %795 = vmatprep.subr.bf16.mxu0 0
      %796 = vmatpush1.bf16.msra.mxu0 0
      %797 = vmatprep.subr.bf16.mxu0 %v781
      %798 = vmatpush1.bf16.msra.mxu0 %v778
      %799 = vmatprep.subr.bf16.mxu0 0
      %800 = vmatpush2.bf16.msra.mxu0 0
      %801 = vmatprep.subr.bf16.mxu0 0
      %802 = vmatpush2.bf16.msra.mxu0 0
      %803 = vmatprep.subr.bf16.mxu0 0
      %804 = vmatpush2.bf16.msra.mxu0 0
      %805 = vmatprep.subr.bf16.mxu0 0
      %806 = vmatpush2.bf16.msra.mxu0 0
      %807 = vmatprep.subr.bf16.mxu0 0
      %808 = vmatpush2.bf16.msra.mxu0 0
      %809 = vmatprep.subr.bf16.mxu0 0
      %810 = vmatpush2.bf16.msra.mxu0 0
      %811 = vmatprep.subr.bf16.mxu0 0
      %812 = vmatpush2.bf16.msra.mxu0 0
      %813 = vmatprep.subr.bf16.mxu0 0
      %814 = vmatpush2.bf16.msra.mxu0 0
      %815 = vmatprep.mubr.bf16.mxu0 0
      %816 = vmatmul.mubr.bf16.gmra.mxu0 %v775
      %v817 = vpop.f32.mrf.mxu0
      %v818 = vadd.f32 0.0, %v817
      %v819 = vpop.f32.mrf.mxu0
      %v820 = vadd.f32 0.0, %v819
      %v821 = vpop.f32.mrf.mxu0
      %v822 = vpop.f32.mrf.mxu0
      %823 = vdwg.mxu0
      %v824 = vadd.f32 %v743, %v818
      %v825 = vadd.f32 %v744, %v820
      %v826 = vld [vmem:[#allocation3] sm:$0x3f]
      %827 = vrot.lane.b32.xlu0 %v569, 113
      %v828 = vpop.permute.xlu0 %827
      %v829 = vrot.slane %v828, 6
      %vm830 = vcmask 924672
      %v831 = vsel %vm830, %v829, %v828
      %v833 = vmul.bf16 %v826, %v831
      %s834 = scalar_lea.vmem %s1, 10
      %v835 = vld [vmem:[%s834] sm:$0x3]
      %v837 = vcombine.high %v833, %v833
      %v839 = vunpack.c.l.s4 1983009808
      %v840 = vunpack.c.0.s8 %v839
      %v841 = vlaneseq
      %v842 = vshrl.u32 %v841, 7
      %v843 = vsub.s32 %v840, %v842
      %v844 = vrot.slane %v833, %v843
      %v846 = vunpack.c.l.s4 1983009808
      %v847 = vunpack.c.0.s8 %v846
      %v848 = vlaneseq
      %v849 = vshrl.u32 %v848, 7
      %v850 = vsub.s32 %v847, %v849
      %v851 = vrot.slane %v837, %v850
      %v852 = vcombine.high %v844, %v844
      %853 = vrot.lane.b32.xlu0 %v844, 15
      %v854 = vpop.permute.xlu0 %853
      %855 = vrot.lane.b32.xlu0 %v852, 15
      %v856 = vpop.permute.xlu0 %855
      %857 = vrot.lane.b32.xlu0 %v851, 15
      %v858 = vpop.permute.xlu0 %857
      %vm859 = vcmask 121856
      %v860 = vsel %vm859, %v854, %v856
      %v861 = vsel %vm859, %v856, %v858
      %v863 = vsel %vm429, %v835, 0
      %v866 = vsel %vm347, %v860, 0
      %v869 = vsel %vm347, %v861, 0
      %871 = vmatprep.subr.bf16.mxu0 0
      %872 = vmatpush1.bf16.msra.mxu0 0
      %873 = vmatprep.subr.bf16.mxu0 0
      %874 = vmatpush1.bf16.msra.mxu0 0
      %875 = vmatprep.subr.bf16.mxu0 0
      %876 = vmatpush1.bf16.msra.mxu0 0
      %877 = vmatprep.subr.bf16.mxu0 0
      %878 = vmatpush1.bf16.msra.mxu0 0
      %879 = vmatprep.subr.bf16.mxu0 0
      %880 = vmatpush1.bf16.msra.mxu0 0
      %881 = vmatprep.subr.bf16.mxu0 0
      %882 = vmatpush1.bf16.msra.mxu0 0
      %883 = vmatprep.subr.bf16.mxu0 0
      %884 = vmatpush1.bf16.msra.mxu0 0
      %885 = vmatprep.subr.bf16.mxu0 %v869
      %886 = vmatpush1.bf16.msra.mxu0 %v866
      %887 = vmatprep.subr.bf16.mxu0 0
      %888 = vmatpush2.bf16.msra.mxu0 0
      %889 = vmatprep.subr.bf16.mxu0 0
      %890 = vmatpush2.bf16.msra.mxu0 0
      %891 = vmatprep.subr.bf16.mxu0 0
      %892 = vmatpush2.bf16.msra.mxu0 0
      %893 = vmatprep.subr.bf16.mxu0 0
      %894 = vmatpush2.bf16.msra.mxu0 0
      %895 = vmatprep.subr.bf16.mxu0 0
      %896 = vmatpush2.bf16.msra.mxu0 0
      %897 = vmatprep.subr.bf16.mxu0 0
      %898 = vmatpush2.bf16.msra.mxu0 0
      %899 = vmatprep.subr.bf16.mxu0 0
      %900 = vmatpush2.bf16.msra.mxu0 0
      %901 = vmatprep.subr.bf16.mxu0 0
      %902 = vmatpush2.bf16.msra.mxu0 0
      %903 = vmatprep.mubr.bf16.mxu0 0
      %904 = vmatmul.mubr.bf16.gmra.mxu0 %v863
      %v905 = vpop.f32.mrf.mxu0
      %v906 = vadd.f32 0.0, %v905
      %v907 = vpop.f32.mrf.mxu0
      %v908 = vadd.f32 0.0, %v907
      %v909 = vpop.f32.mrf.mxu0
      %v910 = vpop.f32.mrf.mxu0
      %911 = vdwg.mxu0
      %v912 = vadd.f32 %v824, %v906
      %v913 = vadd.f32 %v825, %v908
      %v914 = vld [vmem:[#allocation3] sm:$0x3f]
      %915 = vrot.lane.b32.xlu0 %v403, 127
      %v916 = vpop.permute.xlu0 %915
      %v917 = vrot.slane %v916, 6
      %vm918 = vcmask 1039360
      %v919 = vsel %vm918, %v917, %v916
      %v921 = vmul.bf16 %v914, %v919
      %s922 = scalar_lea.vmem %s1, 12
      %v923 = vld [vmem:[%s922] sm:$0x3]
      %v925 = vcombine.high %v921, %v921
      %v927 = vunpack.c.l.s4 1983009808
      %v928 = vunpack.c.0.s8 %v927
      %v929 = vlaneseq
      %v930 = vshrl.u32 %v929, 7
      %v931 = vsub.s32 %v928, %v930
      %v932 = vrot.slane %v921, %v931
      %v934 = vunpack.c.l.s4 1983009808
      %v935 = vunpack.c.0.s8 %v934
      %v936 = vlaneseq
      %v937 = vshrl.u32 %v936, 7
      %v938 = vsub.s32 %v935, %v937
      %v939 = vrot.slane %v925, %v938
      %v940 = vcombine.high %v932, %v932
      %941 = vrot.lane.b32.xlu0 %v932, 1
      %v942 = vpop.permute.xlu0 %941
      %943 = vrot.lane.b32.xlu0 %v940, 1
      %v944 = vpop.permute.xlu0 %943
      %945 = vrot.lane.b32.xlu0 %v939, 1
      %v946 = vpop.permute.xlu0 %945
      %vm947 = vcmask 7168
      %v948 = vsel %vm947, %v942, %v944
      %v949 = vsel %vm947, %v944, %v946
      %v951 = vsel %vm429, %v923, 0
      %v954 = vsel %vm347, %v948, 0
      %v957 = vsel %vm347, %v949, 0
      %959 = vmatprep.subr.bf16.mxu0 0
      %960 = vmatpush1.bf16.msra.mxu0 0
      %961 = vmatprep.subr.bf16.mxu0 0
      %962 = vmatpush1.bf16.msra.mxu0 0
      %963 = vmatprep.subr.bf16.mxu0 0
      %964 = vmatpush1.bf16.msra.mxu0 0
      %965 = vmatprep.subr.bf16.mxu0 0
      %966 = vmatpush1.bf16.msra.mxu0 0
      %967 = vmatprep.subr.bf16.mxu0 0
      %968 = vmatpush1.bf16.msra.mxu0 0
      %969 = vmatprep.subr.bf16.mxu0 0
      %970 = vmatpush1.bf16.msra.mxu0 0
      %971 = vmatprep.subr.bf16.mxu0 0
      %972 = vmatpush1.bf16.msra.mxu0 0
      %973 = vmatprep.subr.bf16.mxu0 %v957
      %974 = vmatpush1.bf16.msra.mxu0 %v954
      %975 = vmatprep.subr.bf16.mxu0 0
      %976 = vmatpush2.bf16.msra.mxu0 0
      %977 = vmatprep.subr.bf16.mxu0 0
      %978 = vmatpush2.bf16.msra.mxu0 0
      %979 = vmatprep.subr.bf16.mxu0 0
      %980 = vmatpush2.bf16.msra.mxu0 0
      %981 = vmatprep.subr.bf16.mxu0 0
      %982 = vmatpush2.bf16.msra.mxu0 0
      %983 = vmatprep.subr.bf16.mxu0 0
      %984 = vmatpush2.bf16.msra.mxu0 0
      %985 = vmatprep.subr.bf16.mxu0 0
      %986 = vmatpush2.bf16.msra.mxu0 0
      %987 = vmatprep.subr.bf16.mxu0 0
      %988 = vmatpush2.bf16.msra.mxu0 0
      %989 = vmatprep.subr.bf16.mxu0 0
      %990 = vmatpush2.bf16.msra.mxu0 0
      %991 = vmatprep.mubr.bf16.mxu0 0
      %992 = vmatmul.mubr.bf16.gmra.mxu0 %v951
      %v993 = vpop.f32.mrf.mxu0
      %v994 = vadd.f32 0.0, %v993
      %v995 = vpop.f32.mrf.mxu0
      %v996 = vadd.f32 0.0, %v995
      %v997 = vpop.f32.mrf.mxu0
      %v998 = vpop.f32.mrf.mxu0
      %999 = vdwg.mxu0
      %v1000 = vadd.f32 %v912, %v994
      %v1001 = vadd.f32 %v913, %v996
      %v1002 = vld [vmem:[#allocation3 + $0x2] sm:$0xf]
      %s1003 = scalar_lea.vmem %s1, 14
      %v1004 = vld [vmem:[%s1003] sm:$0x3]
      %v1007 = vunpack.c.l.s4 1983009808
      %v1008 = vunpack.c.0.s8 %v1007
      %v1009 = vlaneseq
      %v1010 = vshrl.u32 %v1009, 7
      %v1011 = vsub.s32 %v1008, %v1010
      %v1012 = vrot.slane %v1002, %v1011
      %v1013 = vcombine.high %v1012, %v1012
      %v1015 = vsel %vm429, %v1004, 0
      %v1018 = vsel %vm347, %v1012, 0
      %v1021 = vsel %vm347, %v1013, 0
      %1023 = vmatprep.subr.bf16.mxu0 0
      %1024 = vmatpush1.bf16.msra.mxu0 0
      %1025 = vmatprep.subr.bf16.mxu0 0
      %1026 = vmatpush1.bf16.msra.mxu0 0
      %1027 = vmatprep.subr.bf16.mxu0 0
      %1028 = vmatpush1.bf16.msra.mxu0 0
      %1029 = vmatprep.subr.bf16.mxu0 0
      %1030 = vmatpush1.bf16.msra.mxu0 0
      %1031 = vmatprep.subr.bf16.mxu0 0
      %1032 = vmatpush1.bf16.msra.mxu0 0
      %1033 = vmatprep.subr.bf16.mxu0 0
      %1034 = vmatpush1.bf16.msra.mxu0 0
      %1035 = vmatprep.subr.bf16.mxu0 0
      %1036 = vmatpush1.bf16.msra.mxu0 0
      %1037 = vmatprep.subr.bf16.mxu0 %v1021
      %1038 = vmatpush1.bf16.msra.mxu0 %v1018
      %1039 = vmatprep.subr.bf16.mxu0 0
      %1040 = vmatpush2.bf16.msra.mxu0 0
      %1041 = vmatprep.subr.bf16.mxu0 0
      %1042 = vmatpush2.bf16.msra.mxu0 0
      %1043 = vmatprep.subr.bf16.mxu0 0
      %1044 = vmatpush2.bf16.msra.mxu0 0
      %1045 = vmatprep.subr.bf16.mxu0 0
      %1046 = vmatpush2.bf16.msra.mxu0 0
      %1047 = vmatprep.subr.bf16.mxu0 0
      %1048 = vmatpush2.bf16.msra.mxu0 0
      %1049 = vmatprep.subr.bf16.mxu0 0
      %1050 = vmatpush2.bf16.msra.mxu0 0
      %1051 = vmatprep.subr.bf16.mxu0 0
      %1052 = vmatpush2.bf16.msra.mxu0 0
      %1053 = vmatprep.subr.bf16.mxu0 0
      %1054 = vmatpush2.bf16.msra.mxu0 0
      %1055 = vmatprep.mubr.bf16.mxu0 0
      %1056 = vmatmul.mubr.bf16.gmra.mxu0 %v1015
      %v1057 = vpop.f32.mrf.mxu0
      %v1058 = vadd.f32 0.0, %v1057
      %v1059 = vpop.f32.mrf.mxu0
      %v1060 = vadd.f32 0.0, %v1059
      %v1061 = vpop.f32.mrf.mxu0
      %v1062 = vpop.f32.mrf.mxu0
      %1063 = vdwg.mxu0
      %v1064 = vadd.f32 %v1000, %v1058
      %v1065 = vadd.f32 %v1001, %v1060
      %v1066 = vld [vmem:[#allocation3 + $0x2] sm:$0xf]
      %1067 = vrot.lane.b32.xlu0 %v569, 1
      %v1068 = vpop.permute.xlu0 %1067
      %v1069 = vrot.slane %v1068, 6
      %v1070 = vsel %vm947, %v1069, %v1068
      %v1072 = vmul.bf16 %v1066, %v1070
      %s1073 = scalar_lea.vmem %s1, 16
      %v1074 = vld [vmem:[%s1073] sm:$0x3]
      %v1077 = vunpack.c.l.s4 1983009808
      %v1078 = vunpack.c.0.s8 %v1077
      %v1079 = vlaneseq
      %v1080 = vshrl.u32 %v1079, 7
      %v1081 = vsub.s32 %v1078, %v1080
      %v1082 = vrot.slane %v1072, %v1081
      %v1083 = vcombine.high %v1082, %v1082
      %1084 = vrot.lane.b32.xlu0 %v1082, 127
      %v1085 = vpop.permute.xlu0 %1084
      %1086 = vrot.lane.b32.xlu0 %v1083, 127
      %v1087 = vpop.permute.xlu0 %1086
      %v1088 = vsel %vm918, %v1085, %v1087
      %v1090 = vsel %vm429, %v1074, 0
      %v1093 = vsel %vm347, %v1088, 0
      %v1096 = vsel %vm347, %v1087, 0
      %1098 = vmatprep.subr.bf16.mxu0 0
      %1099 = vmatpush1.bf16.msra.mxu0 0
      %1100 = vmatprep.subr.bf16.mxu0 0
      %1101 = vmatpush1.bf16.msra.mxu0 0
      %1102 = vmatprep.subr.bf16.mxu0 0
      %1103 = vmatpush1.bf16.msra.mxu0 0
      %1104 = vmatprep.subr.bf16.mxu0 0
      %1105 = vmatpush1.bf16.msra.mxu0 0
      %1106 = vmatprep.subr.bf16.mxu0 0
      %1107 = vmatpush1.bf16.msra.mxu0 0
      %1108 = vmatprep.subr.bf16.mxu0 0
      %1109 = vmatpush1.bf16.msra.mxu0 0
      %1110 = vmatprep.subr.bf16.mxu0 0
      %1111 = vmatpush1.bf16.msra.mxu0 0
      %1112 = vmatprep.subr.bf16.mxu0 %v1096
      %1113 = vmatpush1.bf16.msra.mxu0 %v1093
      %1114 = vmatprep.subr.bf16.mxu0 0
      %1115 = vmatpush2.bf16.msra.mxu0 0
      %1116 = vmatprep.subr.bf16.mxu0 0
      %1117 = vmatpush2.bf16.msra.mxu0 0
      %1118 = vmatprep.subr.bf16.mxu0 0
      %1119 = vmatpush2.bf16.msra.mxu0 0
      %1120 = vmatprep.subr.bf16.mxu0 0
      %1121 = vmatpush2.bf16.msra.mxu0 0
      %1122 = vmatprep.subr.bf16.mxu0 0
      %1123 = vmatpush2.bf16.msra.mxu0 0
      %1124 = vmatprep.subr.bf16.mxu0 0
      %1125 = vmatpush2.bf16.msra.mxu0 0
      %1126 = vmatprep.subr.bf16.mxu0 0
      %1127 = vmatpush2.bf16.msra.mxu0 0
      %1128 = vmatprep.subr.bf16.mxu0 0
      %1129 = vmatpush2.bf16.msra.mxu0 0
      %1130 = vmatprep.mubr.bf16.mxu0 0
      %1131 = vmatmul.mubr.bf16.gmra.mxu0 %v1090
      %v1132 = vpop.f32.mrf.mxu0
      %v1133 = vadd.f32 0.0, %v1132
      %v1134 = vpop.f32.mrf.mxu0
      %v1135 = vadd.f32 0.0, %v1134
      %v1136 = vpop.f32.mrf.mxu0
      %v1137 = vpop.f32.mrf.mxu0
      %1138 = vdwg.mxu0
      %v1139 = vadd.f32 %v1064, %v1133
      %v1140 = vadd.f32 %v1065, %v1135
      %v1141 = vld [vmem:[%s2] sm:$0xf]
      %1143 = vset.pattern.permute.xlu0 0
      %1144 = vperm.xlu0 %1143, %v1141
      %v1145 = vpop.permute.xlu0 %1144
      %v1147 = vadd.f32 %v1139, %v1145
      %v1148 = vadd.f32 %v1140, %v1145
      %v1149 = vmax.f32 %v1147, 0.0
      %v1150 = vmax.f32 %v1148, 0.0
      %v1151 = vpack.c.bf16 %v1149, %v1149
      %v1152 = vpack.c.bf16 %v1150, %v1150
      %v1155 = vcombine.low %v1151, %v1152
      %v1157 = vunpack.c.l.s4 1983009808
      %v1158 = vunpack.c.0.s8 %v1157
      %v1159 = vlaneseq
      %v1160 = vshrl.u32 %v1159, 7
      %v1161 = vsub.s32 %v1158, %v1160
      %v1162 = vrot.slane %v1155, %v1161
      %vm1164 = vcmask 257026
      %vm1165 = vmor %vm1164, %vm347
      %1166 = vst.msk [vmem:[#allocation4 + $0x2] sm:$0xf] %vm1165, %v1162
      // Predicated region
      $region57: #{resblock_forward.1} parent=51 // pred_check
        %p1167 = pneg %p327
      $region58: #{resblock_forward.1} parent=51 // pred_check_branch
        %1169 = sbr.rel (%p1167) target = $region60
      $region59: #{resblock_forward.1} parent=51 // pred_region
        %vm1170 = vcmask 123904
        %1171 = vst.msk [vmem:[#allocation4 + $0x2] sm:$0x3] %vm1170, 0
      $region60: #{resblock_forward.1} parent=51 // pred_fallthru
        _
      %p1172 = scmp.eq.s32.totalorder %s24, 3
      // Predicated region
      $region61: #{resblock_forward.1} parent=51 // pred_check
        %p1173 = pneg %p1172
      $region62: #{resblock_forward.1} parent=51 // pred_check_branch
        %1175 = sbr.rel (%p1173) target = $region64
      $region63: #{resblock_forward.1} parent=51 // pred_region
        %vm1176 = vcmask 255104
        %1177 = vst.msk [vmem:[#allocation4 + $0x4] sm:$0x3] %vm1176, 0
      $region64: #{resblock_forward.1} parent=51 // pred_fallthru
        _
      %v1178 = vld [vmem:[#allocation4] sm:$0xf]
      %v1180 = vpack.i.b16 %v355, %v355
      %v1182 = vlaneseq
      %v1183 = vshrl.u32 %v1182, 7
      %v1184 = vsub.s32 0, %v1183
      %v1185 = vrot.slane %v1180, %v1184
      %v1188 = vunpack.c.l.s4 1983009808
      %v1189 = vunpack.c.0.s8 %v1188
      %v1190 = vlaneseq
      %v1191 = vshrl.u32 %v1190, 7
      %v1192 = vsub.s32 %v1189, %v1191
      %v1193 = vrot.slane %v1185, %v1192
      %1194 = vrot.lane.b32.xlu0 %v1193, 127
      %v1195 = vpop.permute.xlu0 %1194
      %v1196 = vrot.slane %v1195, 6
      %v1197 = vsel %vm918, %v1196, %v1195
      %v1199 = vmul.bf16 %v1178, %v1197
      %v1200 = vld [vmem:[%s3] sm:$0xf]
      %v1201 = vld [vmem:[#allocation4 + $0x2] sm:$0x3]
      %s1202 = scalar_lea.vmem %s3, 4
      %v1203 = vld [vmem:[%s1202] sm:$0xf]
      %v1205 = vsel %vm429, %v1203, 0
      %v1208 = vsel %vm347, %v1201, 0
      %1210 = vmatprep.subr.bf16.mxu0 0
      %1211 = vmatpush1.bf16.msra.mxu0 0
      %1212 = vmatprep.subr.bf16.mxu0 0
      %1213 = vmatpush1.bf16.msra.mxu0 0
      %1214 = vmatprep.subr.bf16.mxu0 0
      %1215 = vmatpush1.bf16.msra.mxu0 0
      %1216 = vmatprep.subr.bf16.mxu0 0
      %1217 = vmatpush1.bf16.msra.mxu0 0
      %1218 = vmatprep.subr.bf16.mxu0 0
      %1219 = vmatpush1.bf16.msra.mxu0 0
      %1220 = vmatprep.subr.bf16.mxu0 0
      %1221 = vmatpush1.bf16.msra.mxu0 0
      %1222 = vmatprep.subr.bf16.mxu0 0
      %1223 = vmatpush1.bf16.msra.mxu0 0
      %1224 = vmatprep.subr.bf16.mxu0 0
      %1225 = vmatpush1.bf16.msra.mxu0 %v1208
      %1226 = vmatprep.subr.bf16.mxu0 0
      %1227 = vmatpush2.bf16.msra.mxu0 0
      %1228 = vmatprep.subr.bf16.mxu0 0
      %1229 = vmatpush2.bf16.msra.mxu0 0
      %1230 = vmatprep.subr.bf16.mxu0 0
      %1231 = vmatpush2.bf16.msra.mxu0 0
      %1232 = vmatprep.subr.bf16.mxu0 0
      %1233 = vmatpush2.bf16.msra.mxu0 0
      %1234 = vmatprep.subr.bf16.mxu0 0
      %1235 = vmatpush2.bf16.msra.mxu0 0
      %1236 = vmatprep.subr.bf16.mxu0 0
      %1237 = vmatpush2.bf16.msra.mxu0 0
      %1238 = vmatprep.subr.bf16.mxu0 0
      %1239 = vmatpush2.bf16.msra.mxu0 0
      %1240 = vmatprep.subr.bf16.mxu0 0
      %1241 = vmatpush2.bf16.msra.mxu0 0
      %1242 = vmatprep.mubr.bf16.mxu0 0
      %1243 = vmatmul.mubr.bf16.gmra.mxu0 %v1205
      %v1244 = vpop.f32.mrf.mxu0
      %v1245 = vadd.f32 0.0, %v1244
      %v1246 = vpop.f32.mrf.mxu0
      %v1247 = vpop.f32.mrf.mxu0
      %v1248 = vpop.f32.mrf.mxu0
      %1249 = vdwg.mxu0
      %v1252 = vunpack.c.l.s4 1983009808
      %v1253 = vunpack.c.0.s8 %v1252
      %v1254 = vlaneseq
      %v1255 = vshrl.u32 %v1254, 7
      %v1256 = vsub.s32 %v1253, %v1255
      %v1257 = vrot.slane %v1199, %v1256
      %v1258 = vcombine.high %v1257, %v1257
      %1259 = vrot.lane.b32.xlu0 %v1257, 1
      %v1260 = vpop.permute.xlu0 %1259
      %1261 = vrot.lane.b32.xlu0 %v1258, 1
      %v1262 = vpop.permute.xlu0 %1261
      %v1263 = vsel %vm947, %v1260, %v1262
      %v1265 = vsel %vm429, %v1200, 0
      %v1268 = vsel %vm347, %v1263, 0
      %1270 = vmatprep.subr.bf16.mxu0 0
      %1271 = vmatpush1.bf16.msra.mxu0 0
      %1272 = vmatprep.subr.bf16.mxu0 0
      %1273 = vmatpush1.bf16.msra.mxu0 0
      %1274 = vmatprep.subr.bf16.mxu0 0
      %1275 = vmatpush1.bf16.msra.mxu0 0
      %1276 = vmatprep.subr.bf16.mxu0 0
      %1277 = vmatpush1.bf16.msra.mxu0 0
      %1278 = vmatprep.subr.bf16.mxu0 0
      %1279 = vmatpush1.bf16.msra.mxu0 0
      %1280 = vmatprep.subr.bf16.mxu0 0
      %1281 = vmatpush1.bf16.msra.mxu0 0
      %1282 = vmatprep.subr.bf16.mxu0 0
      %1283 = vmatpush1.bf16.msra.mxu0 0
      %1284 = vmatprep.subr.bf16.mxu0 0
      %1285 = vmatpush1.bf16.msra.mxu0 %v1268
      %1286 = vmatprep.subr.bf16.mxu0 0
      %1287 = vmatpush2.bf16.msra.mxu0 0
      %1288 = vmatprep.subr.bf16.mxu0 0
      %1289 = vmatpush2.bf16.msra.mxu0 0
      %1290 = vmatprep.subr.bf16.mxu0 0
      %1291 = vmatpush2.bf16.msra.mxu0 0
      %1292 = vmatprep.subr.bf16.mxu0 0
      %1293 = vmatpush2.bf16.msra.mxu0 0
      %1294 = vmatprep.subr.bf16.mxu0 0
      %1295 = vmatpush2.bf16.msra.mxu0 0
      %1296 = vmatprep.subr.bf16.mxu0 0
      %1297 = vmatpush2.bf16.msra.mxu0 0
      %1298 = vmatprep.subr.bf16.mxu0 0
      %1299 = vmatpush2.bf16.msra.mxu0 0
      %1300 = vmatprep.subr.bf16.mxu0 0
      %1301 = vmatpush2.bf16.msra.mxu0 0
      %1302 = vmatprep.mubr.bf16.mxu0 0
      %1303 = vmatmul.mubr.bf16.gmra.mxu0 %v1265
      %v1304 = vpop.f32.mrf.mxu0
      %v1305 = vadd.f32 %v1245, %v1304
      %v1306 = vpop.f32.mrf.mxu0
      %v1307 = vpop.f32.mrf.mxu0
      %v1308 = vpop.f32.mrf.mxu0
      %1309 = vdwg.mxu0
      %v1310 = vld [vmem:[#allocation4 + $0x2] sm:$0xf]
      %v1311 = vshrl.u32 %v355, 16
      %v1312 = vpack.i.b16 %v1311, %v1311
      %v1314 = vlaneseq
      %v1315 = vshrl.u32 %v1314, 7
      %v1316 = vsub.s32 0, %v1315
      %v1317 = vrot.slane %v1312, %v1316
      %v1320 = vunpack.c.l.s4 1983009808
      %v1321 = vunpack.c.0.s8 %v1320
      %v1322 = vlaneseq
      %v1323 = vshrl.u32 %v1322, 7
      %v1324 = vsub.s32 %v1321, %v1323
      %v1325 = vrot.slane %v1317, %v1324
      %1326 = vrot.lane.b32.xlu0 %v1325, 1
      %v1327 = vpop.permute.xlu0 %1326
      %v1328 = vrot.slane %v1327, 6
      %v1329 = vsel %vm947, %v1328, %v1327
      %v1331 = vmul.bf16 %v1310, %v1329
      %s1332 = scalar_lea.vmem %s3, 8
      %v1333 = vld [vmem:[%s1332] sm:$0xf]
      %v1336 = vunpack.c.l.s4 1983009808
      %v1337 = vunpack.c.0.s8 %v1336
      %v1338 = vlaneseq
      %v1339 = vshrl.u32 %v1338, 7
      %v1340 = vsub.s32 %v1337, %v1339
      %v1341 = vrot.slane %v1331, %v1340
      %v1342 = vcombine.high %v1341, %v1341
      %1343 = vrot.lane.b32.xlu0 %v1341, 127
      %v1344 = vpop.permute.xlu0 %1343
      %1345 = vrot.lane.b32.xlu0 %v1342, 127
      %v1346 = vpop.permute.xlu0 %1345
      %v1347 = vsel %vm918, %v1344, %v1346
      %v1349 = vsel %vm429, %v1333, 0
      %v1352 = vsel %vm347, %v1347, 0
      %1354 = vmatprep.subr.bf16.mxu0 0
      %1355 = vmatpush1.bf16.msra.mxu0 0
      %1356 = vmatprep.subr.bf16.mxu0 0
      %1357 = vmatpush1.bf16.msra.mxu0 0
      %1358 = vmatprep.subr.bf16.mxu0 0
      %1359 = vmatpush1.bf16.msra.mxu0 0
      %1360 = vmatprep.subr.bf16.mxu0 0
      %1361 = vmatpush1.bf16.msra.mxu0 0
      %1362 = vmatprep.subr.bf16.mxu0 0
      %1363 = vmatpush1.bf16.msra.mxu0 0
      %1364 = vmatprep.subr.bf16.mxu0 0
      %1365 = vmatpush1.bf16.msra.mxu0 0
      %1366 = vmatprep.subr.bf16.mxu0 0
      %1367 = vmatpush1.bf16.msra.mxu0 0
      %1368 = vmatprep.subr.bf16.mxu0 0
      %1369 = vmatpush1.bf16.msra.mxu0 %v1352
      %1370 = vmatprep.subr.bf16.mxu0 0
      %1371 = vmatpush2.bf16.msra.mxu0 0
      %1372 = vmatprep.subr.bf16.mxu0 0
      %1373 = vmatpush2.bf16.msra.mxu0 0
      %1374 = vmatprep.subr.bf16.mxu0 0
      %1375 = vmatpush2.bf16.msra.mxu0 0
      %1376 = vmatprep.subr.bf16.mxu0 0
      %1377 = vmatpush2.bf16.msra.mxu0 0
      %1378 = vmatprep.subr.bf16.mxu0 0
      %1379 = vmatpush2.bf16.msra.mxu0 0
      %1380 = vmatprep.subr.bf16.mxu0 0
      %1381 = vmatpush2.bf16.msra.mxu0 0
      %1382 = vmatprep.subr.bf16.mxu0 0
      %1383 = vmatpush2.bf16.msra.mxu0 0
      %1384 = vmatprep.subr.bf16.mxu0 0
      %1385 = vmatpush2.bf16.msra.mxu0 0
      %1386 = vmatprep.mubr.bf16.mxu0 0
      %1387 = vmatmul.mubr.bf16.gmra.mxu0 %v1349
      %v1388 = vpop.f32.mrf.mxu0
      %v1389 = vadd.f32 0.0, %v1388
      %v1390 = vpop.f32.mrf.mxu0
      %v1391 = vpop.f32.mrf.mxu0
      %v1392 = vpop.f32.mrf.mxu0
      %1393 = vdwg.mxu0
      %v1394 = vadd.f32 %v1305, %v1389
      %v1395 = vld [vmem:[#allocation4 + $0x2] sm:$0xf]
      %1396 = vrot.lane.b32.xlu0 %v1193, 15
      %v1397 = vpop.permute.xlu0 %1396
      %v1398 = vrot.slane %v1397, 6
      %v1399 = vsel %vm859, %v1398, %v1397
      %v1401 = vmul.bf16 %v1395, %v1399
      %s1402 = scalar_lea.vmem %s3, 12
      %v1403 = vld [vmem:[%s1402] sm:$0xf]
      %v1406 = vunpack.c.l.s4 1983009808
      %v1407 = vunpack.c.0.s8 %v1406
      %v1408 = vlaneseq
      %v1409 = vshrl.u32 %v1408, 7
      %v1410 = vsub.s32 %v1407, %v1409
      %v1411 = vrot.slane %v1401, %v1410
      %v1412 = vcombine.high %v1411, %v1411
      %1413 = vrot.lane.b32.xlu0 %v1411, 113
      %v1414 = vpop.permute.xlu0 %1413
      %1415 = vrot.lane.b32.xlu0 %v1412, 113
      %v1416 = vpop.permute.xlu0 %1415
      %v1417 = vsel %vm830, %v1414, %v1416
      %v1419 = vsel %vm429, %v1403, 0
      %v1422 = vsel %vm347, %v1417, 0
      %1424 = vmatprep.subr.bf16.mxu0 0
      %1425 = vmatpush1.bf16.msra.mxu0 0
      %1426 = vmatprep.subr.bf16.mxu0 0
      %1427 = vmatpush1.bf16.msra.mxu0 0
      %1428 = vmatprep.subr.bf16.mxu0 0
      %1429 = vmatpush1.bf16.msra.mxu0 0
      %1430 = vmatprep.subr.bf16.mxu0 0
      %1431 = vmatpush1.bf16.msra.mxu0 0
      %1432 = vmatprep.subr.bf16.mxu0 0
      %1433 = vmatpush1.bf16.msra.mxu0 0
      %1434 = vmatprep.subr.bf16.mxu0 0
      %1435 = vmatpush1.bf16.msra.mxu0 0
      %1436 = vmatprep.subr.bf16.mxu0 0
      %1437 = vmatpush1.bf16.msra.mxu0 0
      %1438 = vmatprep.subr.bf16.mxu0 0
      %1439 = vmatpush1.bf16.msra.mxu0 %v1422
      %1440 = vmatprep.subr.bf16.mxu0 0
      %1441 = vmatpush2.bf16.msra.mxu0 0
      %1442 = vmatprep.subr.bf16.mxu0 0
      %1443 = vmatpush2.bf16.msra.mxu0 0
      %1444 = vmatprep.subr.bf16.mxu0 0
      %1445 = vmatpush2.bf16.msra.mxu0 0
      %1446 = vmatprep.subr.bf16.mxu0 0
      %1447 = vmatpush2.bf16.msra.mxu0 0
      %1448 = vmatprep.subr.bf16.mxu0 0
      %1449 = vmatpush2.bf16.msra.mxu0 0
      %1450 = vmatprep.subr.bf16.mxu0 0
      %1451 = vmatpush2.bf16.msra.mxu0 0
      %1452 = vmatprep.subr.bf16.mxu0 0
      %1453 = vmatpush2.bf16.msra.mxu0 0
      %1454 = vmatprep.subr.bf16.mxu0 0
      %1455 = vmatpush2.bf16.msra.mxu0 0
      %1456 = vmatprep.mubr.bf16.mxu0 0
      %1457 = vmatmul.mubr.bf16.gmra.mxu0 %v1419
      %v1458 = vpop.f32.mrf.mxu0
      %v1459 = vadd.f32 0.0, %v1458
      %v1460 = vpop.f32.mrf.mxu0
      %v1461 = vpop.f32.mrf.mxu0
      %v1462 = vpop.f32.mrf.mxu0
      %1463 = vdwg.mxu0
      %v1464 = vadd.f32 %v1394, %v1459
      %v1465 = vld [vmem:[#allocation4 + $0x2] sm:$0xf]
      %s1466 = scalar_lea.vmem %s3, 16
      %v1467 = vld [vmem:[%s1466] sm:$0xf]
      %v1470 = vunpack.c.l.s4 1983009808
      %v1471 = vunpack.c.0.s8 %v1470
      %v1472 = vlaneseq
      %v1473 = vshrl.u32 %v1472, 7
      %v1474 = vsub.s32 %v1471, %v1473
      %v1475 = vrot.slane %v1465, %v1474
      %v1476 = vcombine.high %v1475, %v1475
      %1477 = vrot.lane.b32.xlu0 %v1475, 112
      %v1478 = vpop.permute.xlu0 %1477
      %1479 = vrot.lane.b32.xlu0 %v1476, 112
      %v1480 = vpop.permute.xlu0 %1479
      %vm1481 = vcmask 916480
      %v1482 = vsel %vm1481, %v1478, %v1480
      %v1484 = vsel %vm429, %v1467, 0
      %v1487 = vsel %vm347, %v1482, 0
      %1489 = vmatprep.subr.bf16.mxu0 0
      %1490 = vmatpush1.bf16.msra.mxu0 0
      %1491 = vmatprep.subr.bf16.mxu0 0
      %1492 = vmatpush1.bf16.msra.mxu0 0
      %1493 = vmatprep.subr.bf16.mxu0 0
      %1494 = vmatpush1.bf16.msra.mxu0 0
      %1495 = vmatprep.subr.bf16.mxu0 0
      %1496 = vmatpush1.bf16.msra.mxu0 0
      %1497 = vmatprep.subr.bf16.mxu0 0
      %1498 = vmatpush1.bf16.msra.mxu0 0
      %1499 = vmatprep.subr.bf16.mxu0 0
      %1500 = vmatpush1.bf16.msra.mxu0 0
      %1501 = vmatprep.subr.bf16.mxu0 0
      %1502 = vmatpush1.bf16.msra.mxu0 0
      %1503 = vmatprep.subr.bf16.mxu0 0
      %1504 = vmatpush1.bf16.msra.mxu0 %v1487
      %1505 = vmatprep.subr.bf16.mxu0 0
      %1506 = vmatpush2.bf16.msra.mxu0 0
      %1507 = vmatprep.subr.bf16.mxu0 0
      %1508 = vmatpush2.bf16.msra.mxu0 0
      %1509 = vmatprep.subr.bf16.mxu0 0
      %1510 = vmatpush2.bf16.msra.mxu0 0
      %1511 = vmatprep.subr.bf16.mxu0 0
      %1512 = vmatpush2.bf16.msra.mxu0 0
      %1513 = vmatprep.subr.bf16.mxu0 0
      %1514 = vmatpush2.bf16.msra.mxu0 0
      %1515 = vmatprep.subr.bf16.mxu0 0
      %1516 = vmatpush2.bf16.msra.mxu0 0
      %1517 = vmatprep.subr.bf16.mxu0 0
      %1518 = vmatpush2.bf16.msra.mxu0 0
      %1519 = vmatprep.subr.bf16.mxu0 0
      %1520 = vmatpush2.bf16.msra.mxu0 0
      %1521 = vmatprep.mubr.bf16.mxu0 0
      %1522 = vmatmul.mubr.bf16.gmra.mxu0 %v1484
      %v1523 = vpop.f32.mrf.mxu0
      %v1524 = vadd.f32 0.0, %v1523
      %v1525 = vpop.f32.mrf.mxu0
      %v1526 = vpop.f32.mrf.mxu0
      %v1527 = vpop.f32.mrf.mxu0
      %1528 = vdwg.mxu0
      %v1529 = vadd.f32 %v1464, %v1524
      %v1530 = vld [vmem:[#allocation4 + $0x2] sm:$0xf]
      %1531 = vrot.lane.b32.xlu0 %v1325, 17
      %v1532 = vpop.permute.xlu0 %1531
      %v1533 = vrot.slane %v1532, 6
      %v1534 = vsel %vm690, %v1533, %v1532
      %v1536 = vmul.bf16 %v1530, %v1534
      %s1537 = scalar_lea.vmem %s3, 20
      %v1538 = vld [vmem:[%s1537] sm:$0xf]
      %v1541 = vunpack.c.l.s4 1983009808
      %v1542 = vunpack.c.0.s8 %v1541
      %v1543 = vlaneseq
      %v1544 = vshrl.u32 %v1543, 7
      %v1545 = vsub.s32 %v1542, %v1544
      %v1546 = vrot.slane %v1536, %v1545
      %v1547 = vcombine.high %v1546, %v1546
      %1548 = vrot.lane.b32.xlu0 %v1546, 111
      %v1549 = vpop.permute.xlu0 %1548
      %1550 = vrot.lane.b32.xlu0 %v1547, 111
      %v1551 = vpop.permute.xlu0 %1550
      %v1552 = vsel %vm661, %v1549, %v1551
      %v1554 = vsel %vm429, %v1538, 0
      %v1557 = vsel %vm347, %v1552, 0
      %1559 = vmatprep.subr.bf16.mxu0 0
      %1560 = vmatpush1.bf16.msra.mxu0 0
      %1561 = vmatprep.subr.bf16.mxu0 0
      %1562 = vmatpush1.bf16.msra.mxu0 0
      %1563 = vmatprep.subr.bf16.mxu0 0
      %1564 = vmatpush1.bf16.msra.mxu0 0
      %1565 = vmatprep.subr.bf16.mxu0 0
      %1566 = vmatpush1.bf16.msra.mxu0 0
      %1567 = vmatprep.subr.bf16.mxu0 0
      %1568 = vmatpush1.bf16.msra.mxu0 0
      %1569 = vmatprep.subr.bf16.mxu0 0
      %1570 = vmatpush1.bf16.msra.mxu0 0
      %1571 = vmatprep.subr.bf16.mxu0 0
      %1572 = vmatpush1.bf16.msra.mxu0 0
      %1573 = vmatprep.subr.bf16.mxu0 0
      %1574 = vmatpush1.bf16.msra.mxu0 %v1557
      %1575 = vmatprep.subr.bf16.mxu0 0
      %1576 = vmatpush2.bf16.msra.mxu0 0
      %1577 = vmatprep.subr.bf16.mxu0 0
      %1578 = vmatpush2.bf16.msra.mxu0 0
      %1579 = vmatprep.subr.bf16.mxu0 0
      %1580 = vmatpush2.bf16.msra.mxu0 0
      %1581 = vmatprep.subr.bf16.mxu0 0
      %1582 = vmatpush2.bf16.msra.mxu0 0
      %1583 = vmatprep.subr.bf16.mxu0 0
      %1584 = vmatpush2.bf16.msra.mxu0 0
      %1585 = vmatprep.subr.bf16.mxu0 0
      %1586 = vmatpush2.bf16.msra.mxu0 0
      %1587 = vmatprep.subr.bf16.mxu0 0
      %1588 = vmatpush2.bf16.msra.mxu0 0
      %1589 = vmatprep.subr.bf16.mxu0 0
      %1590 = vmatpush2.bf16.msra.mxu0 0
      %1591 = vmatprep.mubr.bf16.mxu0 0
      %1592 = vmatmul.mubr.bf16.gmra.mxu0 %v1554
      %v1593 = vpop.f32.mrf.mxu0
      %v1594 = vadd.f32 0.0, %v1593
      %v1595 = vpop.f32.mrf.mxu0
      %v1596 = vpop.f32.mrf.mxu0
      %v1597 = vpop.f32.mrf.mxu0
      %1598 = vdwg.mxu0
      %v1599 = vadd.f32 %v1529, %v1594
      %v1600 = vld [vmem:[#allocation4 + $0x2] sm:$0xf]
      %1601 = vrot.lane.b32.xlu0 %v1193, 31
      %v1602 = vpop.permute.xlu0 %1601
      %v1603 = vrot.slane %v1602, 6
      %v1604 = vsel %vm602, %v1603, %v1602
      %v1606 = vmul.bf16 %v1600, %v1604
      %s1607 = scalar_lea.vmem %s3, 24
      %v1608 = vld [vmem:[%s1607] sm:$0xf]
      %v1611 = vunpack.c.l.s4 1983009808
      %v1612 = vunpack.c.0.s8 %v1611
      %v1613 = vlaneseq
      %v1614 = vshrl.u32 %v1613, 7
      %v1615 = vsub.s32 %v1612, %v1614
      %v1616 = vrot.slane %v1606, %v1615
      %v1617 = vcombine.high %v1616, %v1616
      %1618 = vrot.lane.b32.xlu0 %v1616, 97
      %v1619 = vpop.permute.xlu0 %1618
      %1620 = vrot.lane.b32.xlu0 %v1617, 97
      %v1621 = vpop.permute.xlu0 %1620
      %v1622 = vsel %vm573, %v1619, %v1621
      %v1624 = vsel %vm429, %v1608, 0
      %v1627 = vsel %vm347, %v1622, 0
      %1629 = vmatprep.subr.bf16.mxu0 0
      %1630 = vmatpush1.bf16.msra.mxu0 0
      %1631 = vmatprep.subr.bf16.mxu0 0
      %1632 = vmatpush1.bf16.msra.mxu0 0
      %1633 = vmatprep.subr.bf16.mxu0 0
      %1634 = vmatpush1.bf16.msra.mxu0 0
      %1635 = vmatprep.subr.bf16.mxu0 0
      %1636 = vmatpush1.bf16.msra.mxu0 0
      %1637 = vmatprep.subr.bf16.mxu0 0
      %1638 = vmatpush1.bf16.msra.mxu0 0
      %1639 = vmatprep.subr.bf16.mxu0 0
      %1640 = vmatpush1.bf16.msra.mxu0 0
      %1641 = vmatprep.subr.bf16.mxu0 0
      %1642 = vmatpush1.bf16.msra.mxu0 0
      %1643 = vmatprep.subr.bf16.mxu0 0
      %1644 = vmatpush1.bf16.msra.mxu0 %v1627
      %1645 = vmatprep.subr.bf16.mxu0 0
      %1646 = vmatpush2.bf16.msra.mxu0 0
      %1647 = vmatprep.subr.bf16.mxu0 0
      %1648 = vmatpush2.bf16.msra.mxu0 0
      %1649 = vmatprep.subr.bf16.mxu0 0
      %1650 = vmatpush2.bf16.msra.mxu0 0
      %1651 = vmatprep.subr.bf16.mxu0 0
      %1652 = vmatpush2.bf16.msra.mxu0 0
      %1653 = vmatprep.subr.bf16.mxu0 0
      %1654 = vmatpush2.bf16.msra.mxu0 0
      %1655 = vmatprep.subr.bf16.mxu0 0
      %1656 = vmatpush2.bf16.msra.mxu0 0
      %1657 = vmatprep.subr.bf16.mxu0 0
      %1658 = vmatpush2.bf16.msra.mxu0 0
      %1659 = vmatprep.subr.bf16.mxu0 0
      %1660 = vmatpush2.bf16.msra.mxu0 0
      %1661 = vmatprep.mubr.bf16.mxu0 0
      %1662 = vmatmul.mubr.bf16.gmra.mxu0 %v1624
      %v1663 = vpop.f32.mrf.mxu0
      %v1664 = vadd.f32 0.0, %v1663
      %v1665 = vpop.f32.mrf.mxu0
      %v1666 = vpop.f32.mrf.mxu0
      %v1667 = vpop.f32.mrf.mxu0
      %1668 = vdwg.mxu0
      %v1669 = vadd.f32 %v1599, %v1664
      %v1670 = vld [vmem:[#allocation4 + $0x2] sm:$0xf]
      %s1671 = scalar_lea.vmem %s3, 28
      %v1672 = vld [vmem:[%s1671] sm:$0xf]
      %v1675 = vunpack.c.l.s4 1983009808
      %v1676 = vunpack.c.0.s8 %v1675
      %v1677 = vlaneseq
      %v1678 = vshrl.u32 %v1677, 7
      %v1679 = vsub.s32 %v1676, %v1678
      %v1680 = vrot.slane %v1670, %v1679
      %v1681 = vcombine.high %v1680, %v1680
      %1682 = vrot.lane.b32.xlu0 %v1680, 96
      %v1683 = vpop.permute.xlu0 %1682
      %1684 = vrot.lane.b32.xlu0 %v1681, 96
      %v1685 = vpop.permute.xlu0 %1684
      %vm1686 = vcmask 785408
      %v1687 = vsel %vm1686, %v1683, %v1685
      %v1689 = vsel %vm429, %v1672, 0
      %v1692 = vsel %vm347, %v1687, 0
      %1694 = vmatprep.subr.bf16.mxu0 0
      %1695 = vmatpush1.bf16.msra.mxu0 0
      %1696 = vmatprep.subr.bf16.mxu0 0
      %1697 = vmatpush1.bf16.msra.mxu0 0
      %1698 = vmatprep.subr.bf16.mxu0 0
      %1699 = vmatpush1.bf16.msra.mxu0 0
      %1700 = vmatprep.subr.bf16.mxu0 0
      %1701 = vmatpush1.bf16.msra.mxu0 0
      %1702 = vmatprep.subr.bf16.mxu0 0
      %1703 = vmatpush1.bf16.msra.mxu0 0
      %1704 = vmatprep.subr.bf16.mxu0 0
      %1705 = vmatpush1.bf16.msra.mxu0 0
      %1706 = vmatprep.subr.bf16.mxu0 0
      %1707 = vmatpush1.bf16.msra.mxu0 0
      %1708 = vmatprep.subr.bf16.mxu0 0
      %1709 = vmatpush1.bf16.msra.mxu0 %v1692
      %1710 = vmatprep.subr.bf16.mxu0 0
      %1711 = vmatpush2.bf16.msra.mxu0 0
      %1712 = vmatprep.subr.bf16.mxu0 0
      %1713 = vmatpush2.bf16.msra.mxu0 0
      %1714 = vmatprep.subr.bf16.mxu0 0
      %1715 = vmatpush2.bf16.msra.mxu0 0
      %1716 = vmatprep.subr.bf16.mxu0 0
      %1717 = vmatpush2.bf16.msra.mxu0 0
      %1718 = vmatprep.subr.bf16.mxu0 0
      %1719 = vmatpush2.bf16.msra.mxu0 0
      %1720 = vmatprep.subr.bf16.mxu0 0
      %1721 = vmatpush2.bf16.msra.mxu0 0
      %1722 = vmatprep.subr.bf16.mxu0 0
      %1723 = vmatpush2.bf16.msra.mxu0 0
      %1724 = vmatprep.subr.bf16.mxu0 0
      %1725 = vmatpush2.bf16.msra.mxu0 0
      %1726 = vmatprep.mubr.bf16.mxu0 0
      %1727 = vmatmul.mubr.bf16.gmra.mxu0 %v1689
      %v1728 = vpop.f32.mrf.mxu0
      %v1729 = vadd.f32 0.0, %v1728
      %v1730 = vpop.f32.mrf.mxu0
      %v1731 = vpop.f32.mrf.mxu0
      %v1732 = vpop.f32.mrf.mxu0
      %1733 = vdwg.mxu0
      %v1734 = vadd.f32 %v1669, %v1729
      %v1735 = vld [vmem:[#allocation4 + $0x2] sm:$0xf]
      %1736 = vrot.lane.b32.xlu0 %v1325, 33
      %v1737 = vpop.permute.xlu0 %1736
      %v1738 = vrot.slane %v1737, 6
      %v1739 = vsel %vm493, %v1738, %v1737
      %v1741 = vmul.bf16 %v1735, %v1739
      %s1742 = scalar_lea.vmem %s3, 32
      %v1743 = vld [vmem:[%s1742] sm:$0xf]
      %v1746 = vunpack.c.l.s4 1983009808
      %v1747 = vunpack.c.0.s8 %v1746
      %v1748 = vlaneseq
      %v1749 = vshrl.u32 %v1748, 7
      %v1750 = vsub.s32 %v1747, %v1749
      %v1751 = vrot.slane %v1741, %v1750
      %v1752 = vcombine.high %v1751, %v1751
      %1753 = vrot.lane.b32.xlu0 %v1751, 95
      %v1754 = vpop.permute.xlu0 %1753
      %1755 = vrot.lane.b32.xlu0 %v1752, 95
      %v1756 = vpop.permute.xlu0 %1755
      %v1757 = vsel %vm407, %v1754, %v1756
      %v1759 = vsel %vm429, %v1743, 0
      %v1762 = vsel %vm347, %v1757, 0
      %1764 = vmatprep.subr.bf16.mxu0 0
      %1765 = vmatpush1.bf16.msra.mxu0 0
      %1766 = vmatprep.subr.bf16.mxu0 0
      %1767 = vmatpush1.bf16.msra.mxu0 0
      %1768 = vmatprep.subr.bf16.mxu0 0
      %1769 = vmatpush1.bf16.msra.mxu0 0
      %1770 = vmatprep.subr.bf16.mxu0 0
      %1771 = vmatpush1.bf16.msra.mxu0 0
      %1772 = vmatprep.subr.bf16.mxu0 0
      %1773 = vmatpush1.bf16.msra.mxu0 0
      %1774 = vmatprep.subr.bf16.mxu0 0
      %1775 = vmatpush1.bf16.msra.mxu0 0
      %1776 = vmatprep.subr.bf16.mxu0 0
      %1777 = vmatpush1.bf16.msra.mxu0 0
      %1778 = vmatprep.subr.bf16.mxu0 0
      %1779 = vmatpush1.bf16.msra.mxu0 %v1762
      %1780 = vmatprep.subr.bf16.mxu0 0
      %1781 = vmatpush2.bf16.msra.mxu0 0
      %1782 = vmatprep.subr.bf16.mxu0 0
      %1783 = vmatpush2.bf16.msra.mxu0 0
      %1784 = vmatprep.subr.bf16.mxu0 0
      %1785 = vmatpush2.bf16.msra.mxu0 0
      %1786 = vmatprep.subr.bf16.mxu0 0
      %1787 = vmatpush2.bf16.msra.mxu0 0
      %1788 = vmatprep.subr.bf16.mxu0 0
      %1789 = vmatpush2.bf16.msra.mxu0 0
      %1790 = vmatprep.subr.bf16.mxu0 0
      %1791 = vmatpush2.bf16.msra.mxu0 0
      %1792 = vmatprep.subr.bf16.mxu0 0
      %1793 = vmatpush2.bf16.msra.mxu0 0
      %1794 = vmatprep.subr.bf16.mxu0 0
      %1795 = vmatpush2.bf16.msra.mxu0 0
      %1796 = vmatprep.mubr.bf16.mxu0 0
      %1797 = vmatmul.mubr.bf16.gmra.mxu0 %v1759
      %v1798 = vpop.f32.mrf.mxu0
      %v1799 = vadd.f32 0.0, %v1798
      %v1800 = vpop.f32.mrf.mxu0
      %v1801 = vpop.f32.mrf.mxu0
      %v1802 = vpop.f32.mrf.mxu0
      %1803 = vdwg.mxu0
      %v1804 = vadd.f32 %v1734, %v1799
      %v1805 = vld [vmem:[%s4] sm:$0xff]
      %1807 = vset.pattern.permute.xlu0 0
      %1808 = vperm.xlu0 %1807, %v1805
      %v1809 = vpop.permute.xlu0 %1808
      %v1811 = vadd.f32 %v1804, %v1809
      %v1812 = vmax.f32 %v1811, 0.0
      %v1813 = vld [vmem:[#allocation3 + $0x2] sm:$0x3]
      %v1814 = vld [vmem:[%s5] sm:$0xf]
      %v1815 = vld [vmem:[%s6] sm:$0xff]
      %1817 = vset.pattern.permute.xlu0 0
      %1818 = vperm.xlu0 %1817, %v1815
      %v1819 = vpop.permute.xlu0 %1818
      %v1822 = vsel %vm429, %v1814, 0
      %v1825 = vsel %vm347, %v1813, 0
      %1827 = vmatprep.subr.bf16.mxu0 0
      %1828 = vmatpush1.bf16.msra.mxu0 0
      %1829 = vmatprep.subr.bf16.mxu0 0
      %1830 = vmatpush1.bf16.msra.mxu0 0
      %1831 = vmatprep.subr.bf16.mxu0 0
      %1832 = vmatpush1.bf16.msra.mxu0 0
      %1833 = vmatprep.subr.bf16.mxu0 0
      %1834 = vmatpush1.bf16.msra.mxu0 0
      %1835 = vmatprep.subr.bf16.mxu0 0
      %1836 = vmatpush1.bf16.msra.mxu0 0
      %1837 = vmatprep.subr.bf16.mxu0 0
      %1838 = vmatpush1.bf16.msra.mxu0 0
      %1839 = vmatprep.subr.bf16.mxu0 0
      %1840 = vmatpush1.bf16.msra.mxu0 0
      %1841 = vmatprep.subr.bf16.mxu0 0
      %1842 = vmatpush1.bf16.msra.mxu0 %v1825
      %1843 = vmatprep.subr.bf16.mxu0 0
      %1844 = vmatpush2.bf16.msra.mxu0 0
      %1845 = vmatprep.subr.bf16.mxu0 0
      %1846 = vmatpush2.bf16.msra.mxu0 0
      %1847 = vmatprep.subr.bf16.mxu0 0
      %1848 = vmatpush2.bf16.msra.mxu0 0
      %1849 = vmatprep.subr.bf16.mxu0 0
      %1850 = vmatpush2.bf16.msra.mxu0 0
      %1851 = vmatprep.subr.bf16.mxu0 0
      %1852 = vmatpush2.bf16.msra.mxu0 0
      %1853 = vmatprep.subr.bf16.mxu0 0
      %1854 = vmatpush2.bf16.msra.mxu0 0
      %1855 = vmatprep.subr.bf16.mxu0 0
      %1856 = vmatpush2.bf16.msra.mxu0 0
      %1857 = vmatprep.subr.bf16.mxu0 0
      %1858 = vmatpush2.bf16.msra.mxu0 0
      %1859 = vmatprep.mubr.bf16.mxu0 0
      %1860 = vmatmul.mubr.bf16.gmra.mxu0 %v1822
      %v1861 = vpop.f32.mrf.mxu0
      %v1862 = vadd.f32 %v1819, %v1861
      %v1863 = vpop.f32.mrf.mxu0
      %v1864 = vpop.f32.mrf.mxu0
      %v1865 = vpop.f32.mrf.mxu0
      %1866 = vdwg.mxu0
      %v1867 = vadd.f32 %v1812, %v1862
      %1868 = vst [vmem:[%s325] sm:$0xff] %v1867
      %p1869 = scmp.lt.s32.totalorder %s23, 1
      %s1870 = scalar_select %p1869, %s23, 1
      %p1871 = scmp.lt.s32.totalorder %s24, 3
      %s1872 = scalar_select %p1871, %s24, 3
      %s1873 = smul.addr %s1870, 4
      %s1874 = sadd.s32 %s1872, %s1873
      %s1875 = smul.addr %s1874, 8
      %s1876 = scalar_lea.vmem %s8, %s1875
      // Predicated region
      $region65: #{resblock_forward.1} parent=51 // pred_check
        %p1877 = pneg %p224
      $region66: #{resblock_forward.1} parent=51 // pred_check_branch
        %1879 = sbr.rel (%p1877) target = $region68
      $region67: #{resblock_forward.1} parent=51 // pred_region
        _
      $region68: #{resblock_forward.1} parent=51 // pred_fallthru
        _
    $region52: #{resblock_forward.1} parent=5 // pred_fallthru
      _
    %p1880 = scmp.le.s32.totalorder 2, %s14
    // Predicated region
    $region69: #{resblock_forward.1} parent=5 // pred_check
      %p1881 = pneg %p1880
    $region70: #{resblock_forward.1} parent=5 // pred_check_branch
      %1883 = sbr.rel (%p1881) target = $region72
    $region71: #{resblock_forward.1} parent=5 // pred_region
      %s1884 = ssub.s32 %s14, 2
      // Predicated region
      $region73: #{resblock_forward.1} parent=71 // pred_check
        %p1885 = pneg %p230
      $region74: #{resblock_forward.1} parent=71 // pred_check_branch
        %1887 = sbr.rel (%p1885) target = $region76
      $region75: #{resblock_forward.1} parent=71 // pred_region
        %p1888 = scmp.lt.s32.totalorder %s25, 1
        %s1889 = scalar_select %p1888, %s25, 1
        %p1890 = scmp.lt.s32.totalorder %s26, 3
        %s1891 = scalar_select %p1890, %s26, 3
        %s1892 = smul.addr %s1889, 4
        %s1893 = sadd.s32 %s1891, %s1892
        %s1894 = smul.addr %s1893, 8
        %s1895 = scalar_lea.vmem %s8, %s1894
      $region76: #{resblock_forward.1} parent=71 // pred_fallthru
        _
    $region72: #{resblock_forward.1} parent=5 // pred_fallthru
      _
  $region6: #{resblock_forward.1} parent=0 // loop_footer
    %s18 = sadd.s32 1, %s14
  $region7: #{resblock_forward.1} parent=0 // loop_footer_branch
    %13 = sbr.rel target = $region3
  $region8: #{resblock_forward.1} parent=0 // loop_exit
    _

</llo_original>
